<compile_context>
chip_gen: v7x
topology: tpu7x:2x2x1
jax: 0.10.0
libtpu: 0.0.40
codegen_flags: <defaults>
</compile_context>

<pallas_src>
import jax
import jax.numpy as jnp
from jax.experimental import pallas as pl
from jax.experimental.pallas import tpu as pltpu

HIDDEN = 64      # LSTM hidden size
FC1 = 128        # fc1 width (folded away at init time)
OUT = 5          # fc2 output width
GP = 128         # lane-aligned gate pitch (one 128-lane stripe per gate)
OUT_PAD = 128    # lane-dense padded output width


def lstm_fc_kernel(x_ref, wih_ref, whh_ref, b_ref, w_ref, bias_ref, out_ref):
    """x: (seq, batch); wih/b: (1, 4*GP); whh: (H, 4*GP);
       w: (H, OUT_PAD); bias: (1, OUT_PAD); out: (batch, OUT_PAD).
       Gate g lives in lanes [g*GP, g*GP+HIDDEN) of the gate axis."""
    seq, batch = x_ref.shape

    # Hoist the input contribution off the serial chain:
    # xw[t] = x[t, :, None] * W_ih + (b_ih + b_hh)   -> (seq, batch, 4*GP)
    xw = x_ref[...][:, :, None] * wih_ref[...] + b_ref[...]
    whh = whh_ref[...]                                # load recurrent weight once

    # Recurrent state carried in vregs (no VMEM scratch round-trips per step).
    h = jnp.zeros((batch, HIDDEN), jnp.float32)
    c = jnp.zeros((batch, HIDDEN), jnp.float32)

    # seq is a small static trip count -> fully unroll so MXU/EUP/VPU work can
    # overlap across timesteps.
    for t in range(seq):
        gates = xw[t] + jnp.dot(h, whh, preferred_element_type=jnp.float32)
        i_g = jax.nn.sigmoid(gates[:, 0 * GP:0 * GP + HIDDEN])
        f_g = jax.nn.sigmoid(gates[:, 1 * GP:1 * GP + HIDDEN])
        g_g = jnp.tanh(gates[:, 2 * GP:2 * GP + HIDDEN])
        o_g = jax.nn.sigmoid(gates[:, 3 * GP:3 * GP + HIDDEN])
        c = f_g * c + i_g * g_g
        h = o_g * jnp.tanh(c)

    # PyTorch uses hidden[1] == c_n as the FC feature; fc2(fc1(.)) is pre-folded
    # into a single (H, OUT_PAD) affine map. Lane-dense (batch, 128) store.
    out_ref[...] = (jnp.dot(c, w_ref[...], preferred_element_type=jnp.float32)
                    + bias_ref[...]).astype(out_ref.dtype)


def mynet_forward(x, kparams):
    """x: (seq, batch) float32 -> (batch, OUT) float32."""
    seq, batch = x.shape
    wih, whh, b, w_fused, b_fused = kparams
    out_pad = pl.pallas_call(
        lstm_fc_kernel,
        out_shape=jax.ShapeDtypeStruct((batch, OUT_PAD), jnp.float32),
        in_specs=[pl.BlockSpec(memory_space=pltpu.VMEM)] * 6,
        out_specs=pl.BlockSpec(memory_space=pltpu.VMEM),
    )(x, wih, whh, b, w_fused, b_fused)
    return out_pad[:, :OUT]


def init_torch_params(key):
    """PyTorch-shaped parameters (synthetic values, deterministic)."""
    ks = jax.random.split(key, 8)
    s = 1.0 / jnp.sqrt(HIDDEN)
    w_ih = jax.random.uniform(ks[0], (4 * HIDDEN, 1), jnp.float32, -s, s)
    w_hh = jax.random.uniform(ks[1], (4 * HIDDEN, HIDDEN), jnp.float32, -s, s)
    b_ih = jax.random.uniform(ks[2], (4 * HIDDEN,), jnp.float32, -s, s)
    b_hh = jax.random.uniform(ks[3], (4 * HIDDEN,), jnp.float32, -s, s)
    s1 = 1.0 / jnp.sqrt(HIDDEN)
    w1 = jax.random.uniform(ks[4], (FC1, HIDDEN), jnp.float32, -s1, s1)
    b1 = jax.random.uniform(ks[5], (FC1,), jnp.float32, -s1, s1)
    s2 = 1.0 / jnp.sqrt(FC1)
    w2 = jax.random.uniform(ks[6], (OUT, FC1), jnp.float32, -s2, s2)
    b2 = jax.random.uniform(ks[7], (OUT,), jnp.float32, -s2, s2)
    return dict(w_ih=w_ih, w_hh=w_hh, b_ih=b_ih, b_hh=b_hh,
                w1=w1, b1=b1, w2=w2, b2=b2)


def pack_params(tp):
    """Repack PyTorch-layout weights into the kernel's lane-aligned layout."""
    wih_pad = jnp.zeros((1, 4 * GP), jnp.float32)
    whh_pad = jnp.zeros((HIDDEN, 4 * GP), jnp.float32)
    b_pad = jnp.zeros((1, 4 * GP), jnp.float32)
    bias = tp["b_ih"] + tp["b_hh"]
    for g in range(4):                      # PyTorch gate order: i, f, g, o
        lo, hi = g * HIDDEN, (g + 1) * HIDDEN
        wih_pad = wih_pad.at[0, g * GP:g * GP + HIDDEN].set(tp["w_ih"][lo:hi, 0])
        whh_pad = whh_pad.at[:, g * GP:g * GP + HIDDEN].set(tp["w_hh"][lo:hi, :].T)
        b_pad = b_pad.at[0, g * GP:g * GP + HIDDEN].set(bias[lo:hi])
    # Fold fc2(fc1(.)): y = c @ (w1^T @ w2^T) + (b1 @ w2^T + b2), zero-padded
    # to 128 output lanes for an unmasked final store.
    w_fused = tp["w1"].T @ tp["w2"].T                    # (H, OUT)
    b_fused = tp["b1"] @ tp["w2"].T + tp["b2"]           # (OUT,)
    w_fused_pad = jnp.zeros((HIDDEN, OUT_PAD), jnp.float32).at[:, :OUT].set(w_fused)
    b_fused_pad = jnp.zeros((1, OUT_PAD), jnp.float32).at[0, :OUT].set(b_fused)
    return (wih_pad, whh_pad, b_pad, w_fused_pad, b_fused_pad)


def _reference(x, tp):
    """Pure-JAX f32 reference of MyNet.forward (unfused, PyTorch layout)."""
    seq, batch = x.shape
    h = jnp.zeros((batch, HIDDEN), jnp.float32)
    c = jnp.zeros((batch, HIDDEN), jnp.float32)
    wih_t = tp["w_ih"].T                     # (1, 4H)
    whh_t = tp["w_hh"].T                     # (H, 4H)
    bias = tp["b_ih"] + tp["b_hh"]
    for t in range(seq):
        gates = x[t].reshape(batch, 1) * wih_t + h @ whh_t + bias
        i_g = jax.nn.sigmoid(gates[:, 0 * HIDDEN:1 * HIDDEN])
        f_g = jax.nn.sigmoid(gates[:, 1 * HIDDEN:2 * HIDDEN])
        g_g = jnp.tanh(gates[:, 2 * HIDDEN:3 * HIDDEN])
        o_g = jax.nn.sigmoid(gates[:, 3 * HIDDEN:4 * HIDDEN])
        c = f_g * c + i_g * g_g
        h = o_g * jnp.tanh(c)
    hid = c @ tp["w1"].T + tp["b1"]          # fc1
    return hid @ tp["w2"].T + tp["b2"]       # fc2


if __name__ == "__main__":
    key = jax.random.PRNGKey(0)
    pkey, xkey = jax.random.split(key)
    tparams = init_torch_params(pkey)
    kparams = pack_params(tparams)

    seq_len, batch = 8, 8
    x = jax.random.normal(xkey, (seq_len, batch), jnp.float32)

    out = jax.block_until_ready(mynet_forward(x, kparams))
    assert out.shape == (batch, OUT)

    ref = _reference(x, tparams)
    assert jnp.allclose(out, ref, atol=1e-4, rtol=1e-4), \
        float(jnp.max(jnp.abs(out - ref)))

    print("KERNEL_OK")
</pallas_src>

<mosaic_0001>
module attributes {stable_mosaic.version = 11 : i64} {
  func.func @lstm_fc_kernel(%arg0: memref<8x8xf32, #tpu.memory_space<vmem>>, %arg1: memref<1x512xf32, #tpu.memory_space<vmem>>, %arg2: memref<64x512xf32, #tpu.memory_space<vmem>>, %arg3: memref<1x512xf32, #tpu.memory_space<vmem>>, %arg4: memref<64x128xf32, #tpu.memory_space<vmem>>, %arg5: memref<1x128xf32, #tpu.memory_space<vmem>>, %arg6: memref<8x128xf32, #tpu.memory_space<vmem>>) attributes {dimension_semantics = [], scalar_prefetch = 0 : i64, scratch_operands = 0 : i64, tpu.core_type = #tpu.core_type<tc>} {
    %c0 = arith.constant 0 : index
    %c0_0 = arith.constant 0 : index
    %0 = vector.load %arg0[%c0, %c0_0] : memref<8x8xf32, #tpu.memory_space<vmem>>, vector<8x8xf32>
    %1 = vector.shape_cast %0 : vector<8x8xf32> to vector<8x8x1xf32>
    %c0_1 = arith.constant 0 : index
    %c0_2 = arith.constant 0 : index
    %2 = vector.load %arg1[%c0_1, %c0_2] : memref<1x512xf32, #tpu.memory_space<vmem>>, vector<1x512xf32>
    %3 = vector.shape_cast %2 : vector<1x512xf32> to vector<1x1x512xf32>
    %4 = vector.broadcast %1 : vector<8x8x1xf32> to vector<8x8x512xf32>
    %5 = vector.broadcast %3 : vector<1x1x512xf32> to vector<8x8x512xf32>
    %6 = arith.mulf %4, %5 : vector<8x8x512xf32>
    %c0_3 = arith.constant 0 : index
    %c0_4 = arith.constant 0 : index
    %7 = vector.load %arg3[%c0_3, %c0_4] : memref<1x512xf32, #tpu.memory_space<vmem>>, vector<1x512xf32>
    %8 = vector.shape_cast %7 : vector<1x512xf32> to vector<1x1x512xf32>
    %9 = vector.broadcast %8 : vector<1x1x512xf32> to vector<8x8x512xf32>
    %10 = arith.addf %6, %9 : vector<8x8x512xf32>
    %c0_5 = arith.constant 0 : index
    %c0_6 = arith.constant 0 : index
    %11 = vector.load %arg2[%c0_5, %c0_6] : memref<64x512xf32, #tpu.memory_space<vmem>>, vector<64x512xf32>
    %cst = arith.constant 0.000000e+00 : f32
    %12 = vector.broadcast %cst : f32 to vector<8x64xf32>
    %cst_7 = arith.constant 0.000000e+00 : f32
    %13 = vector.broadcast %cst_7 : f32 to vector<8x64xf32>
    %14 = vector.extract_strided_slice %10 {offsets = [0, 0, 0], sizes = [1, 8, 512], strides = [1, 1, 1]} : vector<8x8x512xf32> to vector<1x8x512xf32>
    %15 = vector.shape_cast %14 : vector<1x8x512xf32> to vector<8x512xf32>
    %cst_8 = arith.constant dense<0.000000e+00> : vector<8x512xf32>
    %16 = tpu.matmul %12, %11, %cst_8 {dimension_numbers = #tpu.dot_dimension_numbers<[1], [0], [0], [1], [0, 0, 1, 1], [], []>} : vector<8x64xf32>, vector<64x512xf32>, vector<8x512xf32> -> vector<8x512xf32>
    %17 = arith.addf %15, %16 : vector<8x512xf32>
    %18 = vector.extract_strided_slice %17 {offsets = [0, 0], sizes = [8, 64], strides = [1, 1]} : vector<8x512xf32> to vector<8x64xf32>
    %19 = arith.negf %18 : vector<8x64xf32>
    %20 = math.exp %19 : vector<8x64xf32>
    %cst_9 = arith.constant 1.000000e+00 : f32
    %21 = vector.broadcast %cst_9 : f32 to vector<8x64xf32>
    %22 = arith.addf %21, %20 : vector<8x64xf32>
    %23 = arith.divf %21, %22 : vector<8x64xf32>
    %24 = vector.extract_strided_slice %17 {offsets = [0, 128], sizes = [8, 64], strides = [1, 1]} : vector<8x512xf32> to vector<8x64xf32>
    %25 = arith.negf %24 : vector<8x64xf32>
    %26 = math.exp %25 : vector<8x64xf32>
    %cst_10 = arith.constant 1.000000e+00 : f32
    %27 = vector.broadcast %cst_10 : f32 to vector<8x64xf32>
    %28 = arith.addf %27, %26 : vector<8x64xf32>
    %29 = arith.divf %27, %28 : vector<8x64xf32>
    %30 = vector.extract_strided_slice %17 {offsets = [0, 256], sizes = [8, 64], strides = [1, 1]} : vector<8x512xf32> to vector<8x64xf32>
    %31 = math.tanh %30 : vector<8x64xf32>
    %32 = vector.extract_strided_slice %17 {offsets = [0, 384], sizes = [8, 64], strides = [1, 1]} : vector<8x512xf32> to vector<8x64xf32>
    %33 = arith.negf %32 : vector<8x64xf32>
    %34 = math.exp %33 : vector<8x64xf32>
    %cst_11 = arith.constant 1.000000e+00 : f32
    %35 = vector.broadcast %cst_11 : f32 to vector<8x64xf32>
    %36 = arith.addf %35, %34 : vector<8x64xf32>
    %37 = arith.divf %35, %36 : vector<8x64xf32>
    %38 = arith.mulf %29, %13 : vector<8x64xf32>
    %39 = arith.mulf %23, %31 : vector<8x64xf32>
    %40 = arith.addf %38, %39 : vector<8x64xf32>
    %41 = math.tanh %40 : vector<8x64xf32>
    %42 = arith.mulf %37, %41 : vector<8x64xf32>
    %43 = vector.extract_strided_slice %10 {offsets = [1, 0, 0], sizes = [1, 8, 512], strides = [1, 1, 1]} : vector<8x8x512xf32> to vector<1x8x512xf32>
    %44 = vector.shape_cast %43 : vector<1x8x512xf32> to vector<8x512xf32>
    %cst_12 = arith.constant dense<0.000000e+00> : vector<8x512xf32>
    %45 = tpu.matmul %42, %11, %cst_12 {dimension_numbers = #tpu.dot_dimension_numbers<[1], [0], [0], [1], [0, 0, 1, 1], [], []>} : vector<8x64xf32>, vector<64x512xf32>, vector<8x512xf32> -> vector<8x512xf32>
    %46 = arith.addf %44, %45 : vector<8x512xf32>
    %47 = vector.extract_strided_slice %46 {offsets = [0, 0], sizes = [8, 64], strides = [1, 1]} : vector<8x512xf32> to vector<8x64xf32>
    %48 = arith.negf %47 : vector<8x64xf32>
    %49 = math.exp %48 : vector<8x64xf32>
    %cst_13 = arith.constant 1.000000e+00 : f32
    %50 = vector.broadcast %cst_13 : f32 to vector<8x64xf32>
    %51 = arith.addf %50, %49 : vector<8x64xf32>
    %52 = arith.divf %50, %51 : vector<8x64xf32>
    %53 = vector.extract_strided_slice %46 {offsets = [0, 128], sizes = [8, 64], strides = [1, 1]} : vector<8x512xf32> to vector<8x64xf32>
    %54 = arith.negf %53 : vector<8x64xf32>
    %55 = math.exp %54 : vector<8x64xf32>
    %cst_14 = arith.constant 1.000000e+00 : f32
    %56 = vector.broadcast %cst_14 : f32 to vector<8x64xf32>
    %57 = arith.addf %56, %55 : vector<8x64xf32>
    %58 = arith.divf %56, %57 : vector<8x64xf32>
    %59 = vector.extract_strided_slice %46 {offsets = [0, 256], sizes = [8, 64], strides = [1, 1]} : vector<8x512xf32> to vector<8x64xf32>
    %60 = math.tanh %59 : vector<8x64xf32>
    %61 = vector.extract_strided_slice %46 {offsets = [0, 384], sizes = [8, 64], strides = [1, 1]} : vector<8x512xf32> to vector<8x64xf32>
    %62 = arith.negf %61 : vector<8x64xf32>
    %63 = math.exp %62 : vector<8x64xf32>
    %cst_15 = arith.constant 1.000000e+00 : f32
    %64 = vector.broadcast %cst_15 : f32 to vector<8x64xf32>
    %65 = arith.addf %64, %63 : vector<8x64xf32>
    %66 = arith.divf %64, %65 : vector<8x64xf32>
    %67 = arith.mulf %58, %40 : vector<8x64xf32>
    %68 = arith.mulf %52, %60 : vector<8x64xf32>
    %69 = arith.addf %67, %68 : vector<8x64xf32>
    %70 = math.tanh %69 : vector<8x64xf32>
    %71 = arith.mulf %66, %70 : vector<8x64xf32>
    %72 = vector.extract_strided_slice %10 {offsets = [2, 0, 0], sizes = [1, 8, 512], strides = [1, 1, 1]} : vector<8x8x512xf32> to vector<1x8x512xf32>
    %73 = vector.shape_cast %72 : vector<1x8x512xf32> to vector<8x512xf32>
    %cst_16 = arith.constant dense<0.000000e+00> : vector<8x512xf32>
    %74 = tpu.matmul %71, %11, %cst_16 {dimension_numbers = #tpu.dot_dimension_numbers<[1], [0], [0], [1], [0, 0, 1, 1], [], []>} : vector<8x64xf32>, vector<64x512xf32>, vector<8x512xf32> -> vector<8x512xf32>
    %75 = arith.addf %73, %74 : vector<8x512xf32>
    %76 = vector.extract_strided_slice %75 {offsets = [0, 0], sizes = [8, 64], strides = [1, 1]} : vector<8x512xf32> to vector<8x64xf32>
    %77 = arith.negf %76 : vector<8x64xf32>
    %78 = math.exp %77 : vector<8x64xf32>
    %cst_17 = arith.constant 1.000000e+00 : f32
    %79 = vector.broadcast %cst_17 : f32 to vector<8x64xf32>
    %80 = arith.addf %79, %78 : vector<8x64xf32>
    %81 = arith.divf %79, %80 : vector<8x64xf32>
    %82 = vector.extract_strided_slice %75 {offsets = [0, 128], sizes = [8, 64], strides = [1, 1]} : vector<8x512xf32> to vector<8x64xf32>
    %83 = arith.negf %82 : vector<8x64xf32>
    %84 = math.exp %83 : vector<8x64xf32>
    %cst_18 = arith.constant 1.000000e+00 : f32
    %85 = vector.broadcast %cst_18 : f32 to vector<8x64xf32>
    %86 = arith.addf %85, %84 : vector<8x64xf32>
    %87 = arith.divf %85, %86 : vector<8x64xf32>
    %88 = vector.extract_strided_slice %75 {offsets = [0, 256], sizes = [8, 64], strides = [1, 1]} : vector<8x512xf32> to vector<8x64xf32>
    %89 = math.tanh %88 : vector<8x64xf32>
    %90 = vector.extract_strided_slice %75 {offsets = [0, 384], sizes = [8, 64], strides = [1, 1]} : vector<8x512xf32> to vector<8x64xf32>
    %91 = arith.negf %90 : vector<8x64xf32>
    %92 = math.exp %91 : vector<8x64xf32>
    %cst_19 = arith.constant 1.000000e+00 : f32
    %93 = vector.broadcast %cst_19 : f32 to vector<8x64xf32>
    %94 = arith.addf %93, %92 : vector<8x64xf32>
    %95 = arith.divf %93, %94 : vector<8x64xf32>
    %96 = arith.mulf %87, %69 : vector<8x64xf32>
    %97 = arith.mulf %81, %89 : vector<8x64xf32>
    %98 = arith.addf %96, %97 : vector<8x64xf32>
    %99 = math.tanh %98 : vector<8x64xf32>
    %100 = arith.mulf %95, %99 : vector<8x64xf32>
    %101 = vector.extract_strided_slice %10 {offsets = [3, 0, 0], sizes = [1, 8, 512], strides = [1, 1, 1]} : vector<8x8x512xf32> to vector<1x8x512xf32>
    %102 = vector.shape_cast %101 : vector<1x8x512xf32> to vector<8x512xf32>
    %cst_20 = arith.constant dense<0.000000e+00> : vector<8x512xf32>
    %103 = tpu.matmul %100, %11, %cst_20 {dimension_numbers = #tpu.dot_dimension_numbers<[1], [0], [0], [1], [0, 0, 1, 1], [], []>} : vector<8x64xf32>, vector<64x512xf32>, vector<8x512xf32> -> vector<8x512xf32>
    %104 = arith.addf %102, %103 : vector<8x512xf32>
    %105 = vector.extract_strided_slice %104 {offsets = [0, 0], sizes = [8, 64], strides = [1, 1]} : vector<8x512xf32> to vector<8x64xf32>
    %106 = arith.negf %105 : vector<8x64xf32>
    %107 = math.exp %106 : vector<8x64xf32>
    %cst_21 = arith.constant 1.000000e+00 : f32
    %108 = vector.broadcast %cst_21 : f32 to vector<8x64xf32>
    %109 = arith.addf %108, %107 : vector<8x64xf32>
    %110 = arith.divf %108, %109 : vector<8x64xf32>
    %111 = vector.extract_strided_slice %104 {offsets = [0, 128], sizes = [8, 64], strides = [1, 1]} : vector<8x512xf32> to vector<8x64xf32>
    %112 = arith.negf %111 : vector<8x64xf32>
    %113 = math.exp %112 : vector<8x64xf32>
    %cst_22 = arith.constant 1.000000e+00 : f32
    %114 = vector.broadcast %cst_22 : f32 to vector<8x64xf32>
    %115 = arith.addf %114, %113 : vector<8x64xf32>
    %116 = arith.divf %114, %115 : vector<8x64xf32>
    %117 = vector.extract_strided_slice %104 {offsets = [0, 256], sizes = [8, 64], strides = [1, 1]} : vector<8x512xf32> to vector<8x64xf32>
    %118 = math.tanh %117 : vector<8x64xf32>
    %119 = vector.extract_strided_slice %104 {offsets = [0, 384], sizes = [8, 64], strides = [1, 1]} : vector<8x512xf32> to vector<8x64xf32>
    %120 = arith.negf %119 : vector<8x64xf32>
    %121 = math.exp %120 : vector<8x64xf32>
    %cst_23 = arith.constant 1.000000e+00 : f32
    %122 = vector.broadcast %cst_23 : f32 to vector<8x64xf32>
    %123 = arith.addf %122, %121 : vector<8x64xf32>
    %124 = arith.divf %122, %123 : vector<8x64xf32>
    %125 = arith.mulf %116, %98 : vector<8x64xf32>
    %126 = arith.mulf %110, %118 : vector<8x64xf32>
    %127 = arith.addf %125, %126 : vector<8x64xf32>
    %128 = math.tanh %127 : vector<8x64xf32>
    %129 = arith.mulf %124, %128 : vector<8x64xf32>
    %130 = vector.extract_strided_slice %10 {offsets = [4, 0, 0], sizes = [1, 8, 512], strides = [1, 1, 1]} : vector<8x8x512xf32> to vector<1x8x512xf32>
    %131 = vector.shape_cast %130 : vector<1x8x512xf32> to vector<8x512xf32>
    %cst_24 = arith.constant dense<0.000000e+00> : vector<8x512xf32>
    %132 = tpu.matmul %129, %11, %cst_24 {dimension_numbers = #tpu.dot_dimension_numbers<[1], [0], [0], [1], [0, 0, 1, 1], [], []>} : vector<8x64xf32>, vector<64x512xf32>, vector<8x512xf32> -> vector<8x512xf32>
    %133 = arith.addf %131, %132 : vector<8x512xf32>
    %134 = vector.extract_strided_slice %133 {offsets = [0, 0], sizes = [8, 64], strides = [1, 1]} : vector<8x512xf32> to vector<8x64xf32>
    %135 = arith.negf %134 : vector<8x64xf32>
    %136 = math.exp %135 : vector<8x64xf32>
    %cst_25 = arith.constant 1.000000e+00 : f32
    %137 = vector.broadcast %cst_25 : f32 to vector<8x64xf32>
    %138 = arith.addf %137, %136 : vector<8x64xf32>
    %139 = arith.divf %137, %138 : vector<8x64xf32>
    %140 = vector.extract_strided_slice %133 {offsets = [0, 128], sizes = [8, 64], strides = [1, 1]} : vector<8x512xf32> to vector<8x64xf32>
    %141 = arith.negf %140 : vector<8x64xf32>
    %142 = math.exp %141 : vector<8x64xf32>
    %cst_26 = arith.constant 1.000000e+00 : f32
    %143 = vector.broadcast %cst_26 : f32 to vector<8x64xf32>
    %144 = arith.addf %143, %142 : vector<8x64xf32>
    %145 = arith.divf %143, %144 : vector<8x64xf32>
    %146 = vector.extract_strided_slice %133 {offsets = [0, 256], sizes = [8, 64], strides = [1, 1]} : vector<8x512xf32> to vector<8x64xf32>
    %147 = math.tanh %146 : vector<8x64xf32>
    %148 = vector.extract_strided_slice %133 {offsets = [0, 384], sizes = [8, 64], strides = [1, 1]} : vector<8x512xf32> to vector<8x64xf32>
    %149 = arith.negf %148 : vector<8x64xf32>
    %150 = math.exp %149 : vector<8x64xf32>
    %cst_27 = arith.constant 1.000000e+00 : f32
    %151 = vector.broadcast %cst_27 : f32 to vector<8x64xf32>
    %152 = arith.addf %151, %150 : vector<8x64xf32>
    %153 = arith.divf %151, %152 : vector<8x64xf32>
    %154 = arith.mulf %145, %127 : vector<8x64xf32>
    %155 = arith.mulf %139, %147 : vector<8x64xf32>
    %156 = arith.addf %154, %155 : vector<8x64xf32>
    %157 = math.tanh %156 : vector<8x64xf32>
    %158 = arith.mulf %153, %157 : vector<8x64xf32>
    %159 = vector.extract_strided_slice %10 {offsets = [5, 0, 0], sizes = [1, 8, 512], strides = [1, 1, 1]} : vector<8x8x512xf32> to vector<1x8x512xf32>
    %160 = vector.shape_cast %159 : vector<1x8x512xf32> to vector<8x512xf32>
    %cst_28 = arith.constant dense<0.000000e+00> : vector<8x512xf32>
    %161 = tpu.matmul %158, %11, %cst_28 {dimension_numbers = #tpu.dot_dimension_numbers<[1], [0], [0], [1], [0, 0, 1, 1], [], []>} : vector<8x64xf32>, vector<64x512xf32>, vector<8x512xf32> -> vector<8x512xf32>
    %162 = arith.addf %160, %161 : vector<8x512xf32>
    %163 = vector.extract_strided_slice %162 {offsets = [0, 0], sizes = [8, 64], strides = [1, 1]} : vector<8x512xf32> to vector<8x64xf32>
    %164 = arith.negf %163 : vector<8x64xf32>
    %165 = math.exp %164 : vector<8x64xf32>
    %cst_29 = arith.constant 1.000000e+00 : f32
    %166 = vector.broadcast %cst_29 : f32 to vector<8x64xf32>
    %167 = arith.addf %166, %165 : vector<8x64xf32>
    %168 = arith.divf %166, %167 : vector<8x64xf32>
    %169 = vector.extract_strided_slice %162 {offsets = [0, 128], sizes = [8, 64], strides = [1, 1]} : vector<8x512xf32> to vector<8x64xf32>
    %170 = arith.negf %169 : vector<8x64xf32>
    %171 = math.exp %170 : vector<8x64xf32>
    %cst_30 = arith.constant 1.000000e+00 : f32
    %172 = vector.broadcast %cst_30 : f32 to vector<8x64xf32>
    %173 = arith.addf %172, %171 : vector<8x64xf32>
    %174 = arith.divf %172, %173 : vector<8x64xf32>
    %175 = vector.extract_strided_slice %162 {offsets = [0, 256], sizes = [8, 64], strides = [1, 1]} : vector<8x512xf32> to vector<8x64xf32>
    %176 = math.tanh %175 : vector<8x64xf32>
    %177 = vector.extract_strided_slice %162 {offsets = [0, 384], sizes = [8, 64], strides = [1, 1]} : vector<8x512xf32> to vector<8x64xf32>
    %178 = arith.negf %177 : vector<8x64xf32>
    %179 = math.exp %178 : vector<8x64xf32>
    %cst_31 = arith.constant 1.000000e+00 : f32
    %180 = vector.broadcast %cst_31 : f32 to vector<8x64xf32>
    %181 = arith.addf %180, %179 : vector<8x64xf32>
    %182 = arith.divf %180, %181 : vector<8x64xf32>
    %183 = arith.mulf %174, %156 : vector<8x64xf32>
    %184 = arith.mulf %168, %176 : vector<8x64xf32>
    %185 = arith.addf %183, %184 : vector<8x64xf32>
    %186 = math.tanh %185 : vector<8x64xf32>
    %187 = arith.mulf %182, %186 : vector<8x64xf32>
    %188 = vector.extract_strided_slice %10 {offsets = [6, 0, 0], sizes = [1, 8, 512], strides = [1, 1, 1]} : vector<8x8x512xf32> to vector<1x8x512xf32>
    %189 = vector.shape_cast %188 : vector<1x8x512xf32> to vector<8x512xf32>
    %cst_32 = arith.constant dense<0.000000e+00> : vector<8x512xf32>
    %190 = tpu.matmul %187, %11, %cst_32 {dimension_numbers = #tpu.dot_dimension_numbers<[1], [0], [0], [1], [0, 0, 1, 1], [], []>} : vector<8x64xf32>, vector<64x512xf32>, vector<8x512xf32> -> vector<8x512xf32>
    %191 = arith.addf %189, %190 : vector<8x512xf32>
    %192 = vector.extract_strided_slice %191 {offsets = [0, 0], sizes = [8, 64], strides = [1, 1]} : vector<8x512xf32> to vector<8x64xf32>
    %193 = arith.negf %192 : vector<8x64xf32>
    %194 = math.exp %193 : vector<8x64xf32>
    %cst_33 = arith.constant 1.000000e+00 : f32
    %195 = vector.broadcast %cst_33 : f32 to vector<8x64xf32>
    %196 = arith.addf %195, %194 : vector<8x64xf32>
    %197 = arith.divf %195, %196 : vector<8x64xf32>
    %198 = vector.extract_strided_slice %191 {offsets = [0, 128], sizes = [8, 64], strides = [1, 1]} : vector<8x512xf32> to vector<8x64xf32>
    %199 = arith.negf %198 : vector<8x64xf32>
    %200 = math.exp %199 : vector<8x64xf32>
    %cst_34 = arith.constant 1.000000e+00 : f32
    %201 = vector.broadcast %cst_34 : f32 to vector<8x64xf32>
    %202 = arith.addf %201, %200 : vector<8x64xf32>
    %203 = arith.divf %201, %202 : vector<8x64xf32>
    %204 = vector.extract_strided_slice %191 {offsets = [0, 256], sizes = [8, 64], strides = [1, 1]} : vector<8x512xf32> to vector<8x64xf32>
    %205 = math.tanh %204 : vector<8x64xf32>
    %206 = vector.extract_strided_slice %191 {offsets = [0, 384], sizes = [8, 64], strides = [1, 1]} : vector<8x512xf32> to vector<8x64xf32>
    %207 = arith.negf %206 : vector<8x64xf32>
    %208 = math.exp %207 : vector<8x64xf32>
    %cst_35 = arith.constant 1.000000e+00 : f32
    %209 = vector.broadcast %cst_35 : f32 to vector<8x64xf32>
    %210 = arith.addf %209, %208 : vector<8x64xf32>
    %211 = arith.divf %209, %210 : vector<8x64xf32>
    %212 = arith.mulf %203, %185 : vector<8x64xf32>
    %213 = arith.mulf %197, %205 : vector<8x64xf32>
    %214 = arith.addf %212, %213 : vector<8x64xf32>
    %215 = math.tanh %214 : vector<8x64xf32>
    %216 = arith.mulf %211, %215 : vector<8x64xf32>
    %217 = vector.extract_strided_slice %10 {offsets = [7, 0, 0], sizes = [1, 8, 512], strides = [1, 1, 1]} : vector<8x8x512xf32> to vector<1x8x512xf32>
    %218 = vector.shape_cast %217 : vector<1x8x512xf32> to vector<8x512xf32>
    %cst_36 = arith.constant dense<0.000000e+00> : vector<8x512xf32>
    %219 = tpu.matmul %216, %11, %cst_36 {dimension_numbers = #tpu.dot_dimension_numbers<[1], [0], [0], [1], [0, 0, 1, 1], [], []>} : vector<8x64xf32>, vector<64x512xf32>, vector<8x512xf32> -> vector<8x512xf32>
    %220 = arith.addf %218, %219 : vector<8x512xf32>
    %221 = vector.extract_strided_slice %220 {offsets = [0, 0], sizes = [8, 64], strides = [1, 1]} : vector<8x512xf32> to vector<8x64xf32>
    %222 = arith.negf %221 : vector<8x64xf32>
    %223 = math.exp %222 : vector<8x64xf32>
    %cst_37 = arith.constant 1.000000e+00 : f32
    %224 = vector.broadcast %cst_37 : f32 to vector<8x64xf32>
    %225 = arith.addf %224, %223 : vector<8x64xf32>
    %226 = arith.divf %224, %225 : vector<8x64xf32>
    %227 = vector.extract_strided_slice %220 {offsets = [0, 128], sizes = [8, 64], strides = [1, 1]} : vector<8x512xf32> to vector<8x64xf32>
    %228 = arith.negf %227 : vector<8x64xf32>
    %229 = math.exp %228 : vector<8x64xf32>
    %cst_38 = arith.constant 1.000000e+00 : f32
    %230 = vector.broadcast %cst_38 : f32 to vector<8x64xf32>
    %231 = arith.addf %230, %229 : vector<8x64xf32>
    %232 = arith.divf %230, %231 : vector<8x64xf32>
    %233 = vector.extract_strided_slice %220 {offsets = [0, 256], sizes = [8, 64], strides = [1, 1]} : vector<8x512xf32> to vector<8x64xf32>
    %234 = math.tanh %233 : vector<8x64xf32>
    %235 = arith.mulf %232, %214 : vector<8x64xf32>
    %236 = arith.mulf %226, %234 : vector<8x64xf32>
    %237 = arith.addf %235, %236 : vector<8x64xf32>
    %c0_39 = arith.constant 0 : index
    %c0_40 = arith.constant 0 : index
    %238 = vector.load %arg4[%c0_39, %c0_40] : memref<64x128xf32, #tpu.memory_space<vmem>>, vector<64x128xf32>
    %cst_41 = arith.constant dense<0.000000e+00> : vector<8x128xf32>
    %239 = tpu.matmul %237, %238, %cst_41 {dimension_numbers = #tpu.dot_dimension_numbers<[1], [0], [0], [1], [0, 0, 1, 1], [], []>} : vector<8x64xf32>, vector<64x128xf32>, vector<8x128xf32> -> vector<8x128xf32>
    %c0_42 = arith.constant 0 : index
    %c0_43 = arith.constant 0 : index
    %240 = vector.load %arg5[%c0_42, %c0_43] : memref<1x128xf32, #tpu.memory_space<vmem>>, vector<1x128xf32>
    %241 = vector.broadcast %240 : vector<1x128xf32> to vector<8x128xf32>
    %242 = arith.addf %239, %241 : vector<8x128xf32>
    %c0_44 = arith.constant 0 : index
    %c0_45 = arith.constant 0 : index
    %243 = vector.load %arg6[%c0_44, %c0_45] : memref<8x128xf32, #tpu.memory_space<vmem>>, vector<8x128xf32>
    tpu.vector_store %arg6[%c0_44, %c0_45], %242 {strides = array<i32>} : memref<8x128xf32, #tpu.memory_space<vmem>>, vector<8x128xf32>,
    return
  }
}

</mosaic_0001>

<llo_original>
// kernel: tpu_custom_call.1
$region0: #{tpu_custom_call.1}
  #allocation0 [shape = 'u32[]', space=smem, size = 0x4, offset = 0x4, fixed_abs, tag = 'smem constant byte address 0x4 - core index']
  #allocation1 [shape = 'u32[144,128]{1,0:T(1,128)}', space=vmem, size = 0x12000, scoped, tag = 'internal scratch']
  %s0 = inlined_call_operand.hbm [shape: f32[8,8], index: 0, kind: input, shape index: {}]
  %s1 = inlined_call_operand.hbm [shape: f32[1,512], index: 1, kind: input, shape index: {}]
  %s2 = inlined_call_operand.hbm [shape: f32[64,512], index: 2, kind: input, shape index: {}]
  %s3 = inlined_call_operand.vmem [shape: f32[1,512], index: 3, kind: input, shape index: {}]
  %s4 = inlined_call_operand.hbm [shape: f32[64,128], index: 4, kind: input, shape index: {}]
  %s5 = inlined_call_operand.vmem [shape: f32[1,128], index: 5, kind: input, shape index: {}]
  %s6 = inlined_call_operand.hbm [shape: f32[8,128], index: 6, kind: output, shape index: {}]
  %s7 = sld [smem:[#allocation0]]
  $region50: #{tpu_custom_call.1} parent=0
    _
  %s9 = ssub.s32 1, %s7
  %s10 = scalar_select 0, %s9, %s7
  $region1: #{tpu_custom_call.1} parent=0
    #allocation2 [shape = 'u8[4096]{0}', space=vmem, size = 0x1000, scoped, tag = 'input window, operand 0, single buffered']
    #allocation3 [shape = 's32[1]{0}', space=sflag, size = 0x4, scoped, tag = 'scoped memory for tpu_custom_call.1']
    #allocation4 [shape = 's32[1]{0}', space=sflag, size = 0x4, scoped, tag = 'scoped memory for tpu_custom_call.1']
    #allocation5 [shape = 'u8[2048]{0}', space=vmem, size = 0x800, scoped, tag = 'input window, operand 1, single buffered']
    #allocation6 [shape = 's32[1]{0}', space=sflag, size = 0x4, scoped, tag = 'scoped memory for tpu_custom_call.1']
    #allocation7 [shape = 'u8[131072]{0}', space=vmem, size = 0x20000, scoped, tag = 'input window, operand 2, single buffered']
    #allocation8 [shape = 'u8[32768]{0}', space=vmem, size = 0x8000, scoped, tag = 'input window, operand 4, single buffered']
    #allocation9 [shape = 's32[1]{0}', space=sflag, size = 0x4, scoped, tag = 'scoped memory for tpu_custom_call.1']
    #allocation10 [shape = 'u8[4096]{0}', space=vmem, size = 0x1000, scoped, tag = 'output window, operand 0, single buffered']
    %11 = vsyncpa [#allocation3], 0
    %12 = vsyncpa [#allocation6], 0
    %13 = vsyncpa [#allocation9], 0
    %14 = vsyncpa [#allocation4], 0
    // Predicated region
    $region2: #{tpu_custom_call.1} parent=1 // pred_check
      _
    $region3: #{tpu_custom_call.1} parent=1 // pred_check_branch
      %16 = sbr.rel (0) target = $region5
    $region4: #{tpu_custom_call.1} parent=1 // pred_region
      %s18 = ssub.s32 128, 128
      %19 = vsyncadd [#allocation3], %s18
      %s21 = sshll.u32 [#allocation2], 4
      %s22 = int_to_ptr.vmem [resolvable:$true] %s21
      %24 = dma.hbm_to_vmem [thread:$0]  %s0, 128, %s22, [#allocation3]
    $region5: #{tpu_custom_call.1} parent=1 // pred_fallthru
      _
    // Predicated region
    $region6: #{tpu_custom_call.1} parent=1 // pred_check
      _
    $region7: #{tpu_custom_call.1} parent=1 // pred_check_branch
      %26 = sbr.rel (0) target = $region9
    $region8: #{tpu_custom_call.1} parent=1 // pred_region
      %s28 = ssub.s32 64, 64
      %29 = vsyncadd [#allocation6], %s28
      %s31 = sshll.u32 [#allocation5], 4
      %s32 = int_to_ptr.vmem [resolvable:$true] %s31
      %34 = dma.hbm_to_vmem [thread:$0]  %s1, 64, %s32, [#allocation6]
    $region9: #{tpu_custom_call.1} parent=1 // pred_fallthru
      _
    // Predicated region
    $region10: #{tpu_custom_call.1} parent=1 // pred_check
      _
    $region11: #{tpu_custom_call.1} parent=1 // pred_check_branch
      %36 = sbr.rel (0) target = $region13
    $region12: #{tpu_custom_call.1} parent=1 // pred_region
      %s38 = ssub.s32 4096, 4096
      %39 = vsyncadd [#allocation6], %s38
      %s40 = sshll.u32 [#allocation7], 4
      %s41 = int_to_ptr.vmem [resolvable:$true] %s40
      %46 = dma.hbm_to_vmem [thread:$0]  %s2, 4096, %s41, [#allocation6], 512, 512, 32
    $region13: #{tpu_custom_call.1} parent=1 // pred_fallthru
      _
    // Predicated region
    $region14: #{tpu_custom_call.1} parent=1 // pred_check
      _
    $region15: #{tpu_custom_call.1} parent=1 // pred_check_branch
      %48 = sbr.rel (0) target = $region17
    $region16: #{tpu_custom_call.1} parent=1 // pred_region
      _
    $region17: #{tpu_custom_call.1} parent=1 // pred_fallthru
      _
    // Predicated region
    $region18: #{tpu_custom_call.1} parent=1 // pred_check
      _
    $region19: #{tpu_custom_call.1} parent=1 // pred_check_branch
      %50 = sbr.rel (0) target = $region21
    $region20: #{tpu_custom_call.1} parent=1 // pred_region
      %s52 = ssub.s32 1024, 1024
      %53 = vsyncadd [#allocation9], %s52
      %s54 = sshll.u32 [#allocation8], 4
      %s55 = int_to_ptr.vmem [resolvable:$true] %s54
      %60 = dma.hbm_to_vmem [thread:$0]  %s4, 1024, %s55, [#allocation9], 128, 128, 8
    $region21: #{tpu_custom_call.1} parent=1 // pred_fallthru
      _
    // Predicated region
    $region22: #{tpu_custom_call.1} parent=1 // pred_check
      _
    $region23: #{tpu_custom_call.1} parent=1 // pred_check_branch
      %62 = sbr.rel (0) target = $region25
    $region24: #{tpu_custom_call.1} parent=1 // pred_region
      _
    $region25: #{tpu_custom_call.1} parent=1 // pred_fallthru
      _
    // Predicated region
    $region26: #{tpu_custom_call.1} parent=1 // pred_check
      _
    $region27: #{tpu_custom_call.1} parent=1 // pred_check_branch
      %64 = sbr.rel (0) target = $region29
    $region28: #{tpu_custom_call.1} parent=1 // pred_region
      %65 = dma.done [#allocation3], 128
    $region29: #{tpu_custom_call.1} parent=1 // pred_fallthru
      _
    // Predicated region
    $region30: #{tpu_custom_call.1} parent=1 // pred_check
      _
    $region31: #{tpu_custom_call.1} parent=1 // pred_check_branch
      %67 = sbr.rel (0) target = $region33
    $region32: #{tpu_custom_call.1} parent=1 // pred_region
      %68 = dma.done [#allocation6], 64
    $region33: #{tpu_custom_call.1} parent=1 // pred_fallthru
      _
    // Predicated region
    $region34: #{tpu_custom_call.1} parent=1 // pred_check
      _
    $region35: #{tpu_custom_call.1} parent=1 // pred_check_branch
      %70 = sbr.rel (0) target = $region37
    $region36: #{tpu_custom_call.1} parent=1 // pred_region
      %71 = dma.done [#allocation6], 4096
    $region37: #{tpu_custom_call.1} parent=1 // pred_fallthru
      _
    // Predicated region
    $region38: #{tpu_custom_call.1} parent=1 // pred_check
      _
    $region39: #{tpu_custom_call.1} parent=1 // pred_check_branch
      %73 = sbr.rel (0) target = $region41
    $region40: #{tpu_custom_call.1} parent=1 // pred_region
      %74 = dma.done [#allocation9], 1024
    $region41: #{tpu_custom_call.1} parent=1 // pred_fallthru
      _
    %v75 = vld [vmem:[#allocation2] sm:$0xff]
    %v76 = vlaneseq
    %v77 = vshrl.u32 %v76, 7
    %v78 = vsub.s32 0, %v77
    %v79 = vrot.slane %v75, %v78
    %81 = vbcast.lane.b32.xlu0 %v79, 256
    %v82 = vpop.permute.xlu0 %81
    %v83 = vlaneseq
    %v84 = vshrl.u32 %v83, 7
    %v85 = vsub.s32 1, %v84
    %v86 = vrot.slane %v75, %v85
    %88 = vbcast.lane.b32.xlu0 %v86, 256
    %v89 = vpop.permute.xlu0 %88
    %v90 = vlaneseq
    %v91 = vshrl.u32 %v90, 7
    %v92 = vsub.s32 2, %v91
    %v93 = vrot.slane %v75, %v92
    %95 = vbcast.lane.b32.xlu0 %v93, 256
    %v96 = vpop.permute.xlu0 %95
    %v97 = vlaneseq
    %v98 = vshrl.u32 %v97, 7
    %v99 = vsub.s32 3, %v98
    %v100 = vrot.slane %v75, %v99
    %102 = vbcast.lane.b32.xlu0 %v100, 256
    %v103 = vpop.permute.xlu0 %102
    %v104 = vlaneseq
    %v105 = vshrl.u32 %v104, 7
    %v106 = vsub.s32 4, %v105
    %v107 = vrot.slane %v75, %v106
    %109 = vbcast.lane.b32.xlu0 %v107, 256
    %v110 = vpop.permute.xlu0 %109
    %v111 = vlaneseq
    %v112 = vshrl.u32 %v111, 7
    %v113 = vsub.s32 5, %v112
    %v114 = vrot.slane %v75, %v113
    %116 = vbcast.lane.b32.xlu0 %v114, 256
    %v117 = vpop.permute.xlu0 %116
    %v118 = vlaneseq
    %v119 = vshrl.u32 %v118, 7
    %v120 = vsub.s32 6, %v119
    %v121 = vrot.slane %v75, %v120
    %123 = vbcast.lane.b32.xlu0 %v121, 256
    %v124 = vpop.permute.xlu0 %123
    %v125 = vlaneseq
    %v126 = vshrl.u32 %v125, 7
    %v127 = vsub.s32 7, %v126
    %v128 = vrot.slane %v75, %v127
    %130 = vbcast.lane.b32.xlu0 %v128, 256
    %v131 = vpop.permute.xlu0 %130
    %v132 = vld [vmem:[#allocation5] sm:$0xf]
    %v134 = vlaneseq
    %v135 = vshrl.u32 %v134, 7
    %v136 = vsub.s32 0, %v135
    %v137 = vrot.slane %v132, %v136
    %v138 = vlaneseq
    %v139 = vshrl.u32 %v138, 7
    %v140 = vsub.s32 1, %v139
    %v141 = vrot.slane %v132, %v140
    %v142 = vlaneseq
    %v143 = vshrl.u32 %v142, 7
    %v144 = vsub.s32 2, %v143
    %v145 = vrot.slane %v132, %v144
    %v146 = vlaneseq
    %v147 = vshrl.u32 %v146, 7
    %v148 = vsub.s32 3, %v147
    %v149 = vrot.slane %v132, %v148
    %v154 = vmul.f32 %v82, %v137
    %v155 = vmul.f32 %v82, %v141
    %v156 = vmul.f32 %v82, %v145
    %v157 = vmul.f32 %v82, %v149
    %v158 = vmul.f32 %v89, %v137
    %v159 = vmul.f32 %v89, %v141
    %v160 = vmul.f32 %v89, %v145
    %v161 = vmul.f32 %v89, %v149
    %v162 = vmul.f32 %v96, %v137
    %v163 = vmul.f32 %v96, %v141
    %v164 = vmul.f32 %v96, %v145
    %v165 = vmul.f32 %v96, %v149
    %v166 = vmul.f32 %v103, %v137
    %v167 = vmul.f32 %v103, %v141
    %v168 = vmul.f32 %v103, %v145
    %v169 = vmul.f32 %v103, %v149
    %v170 = vmul.f32 %v110, %v137
    %v171 = vmul.f32 %v110, %v141
    %v172 = vmul.f32 %v110, %v145
    %v173 = vmul.f32 %v110, %v149
    %v174 = vmul.f32 %v117, %v137
    %v175 = vmul.f32 %v117, %v141
    %v176 = vmul.f32 %v117, %v145
    %v177 = vmul.f32 %v117, %v149
    %v178 = vmul.f32 %v124, %v137
    %v179 = vmul.f32 %v124, %v141
    %v180 = vmul.f32 %v124, %v145
    %v181 = vmul.f32 %v124, %v149
    %v182 = vmul.f32 %v131, %v137
    %v183 = vmul.f32 %v131, %v141
    %v184 = vmul.f32 %v131, %v145
    %v185 = vld [vmem:[%s3] sm:$0xf]
    %v187 = vlaneseq
    %v188 = vshrl.u32 %v187, 7
    %v189 = vsub.s32 0, %v188
    %v190 = vrot.slane %v185, %v189
    %v191 = vlaneseq
    %v192 = vshrl.u32 %v191, 7
    %v193 = vsub.s32 1, %v192
    %v194 = vrot.slane %v185, %v193
    %v195 = vlaneseq
    %v196 = vshrl.u32 %v195, 7
    %v197 = vsub.s32 2, %v196
    %v198 = vrot.slane %v185, %v197
    %v199 = vlaneseq
    %v200 = vshrl.u32 %v199, 7
    %v201 = vsub.s32 3, %v200
    %v202 = vrot.slane %v185, %v201
    %v207 = vadd.f32 %v154, %v190
    %v208 = vadd.f32 %v155, %v194
    %v209 = vadd.f32 %v156, %v198
    %v210 = vadd.f32 %v157, %v202
    %v211 = vadd.f32 %v158, %v190
    %v212 = vadd.f32 %v159, %v194
    %v213 = vadd.f32 %v160, %v198
    %v214 = vadd.f32 %v161, %v202
    %v215 = vadd.f32 %v162, %v190
    %v216 = vadd.f32 %v163, %v194
    %v217 = vadd.f32 %v164, %v198
    %v218 = vadd.f32 %v165, %v202
    %v219 = vadd.f32 %v166, %v190
    %v220 = vadd.f32 %v167, %v194
    %v221 = vadd.f32 %v168, %v198
    %v222 = vadd.f32 %v169, %v202
    %v223 = vadd.f32 %v170, %v190
    %v224 = vadd.f32 %v171, %v194
    %v225 = vadd.f32 %v172, %v198
    %v226 = vadd.f32 %v173, %v202
    %v227 = vadd.f32 %v174, %v190
    %v228 = vadd.f32 %v175, %v194
    %v229 = vadd.f32 %v176, %v198
    %v230 = vadd.f32 %v177, %v202
    %v231 = vadd.f32 %v178, %v190
    %v232 = vadd.f32 %v179, %v194
    %v233 = vadd.f32 %v180, %v198
    %v234 = vadd.f32 %v181, %v202
    %v235 = vadd.f32 %v182, %v190
    %v236 = vadd.f32 %v183, %v194
    %v237 = vadd.f32 %v184, %v198
    %v238 = vld [vmem:[#allocation7] sm:$0xff]
    %v239 = vld [vmem:[#allocation7 + $0x8] sm:$0xff]
    %v240 = vld [vmem:[#allocation7 + $0x10] sm:$0xff]
    %v241 = vld [vmem:[#allocation7 + $0x18] sm:$0xff]
    %v242 = vld [vmem:[#allocation7 + $0x20] sm:$0xff]
    %v243 = vld [vmem:[#allocation7 + $0x28] sm:$0xff]
    %v244 = vld [vmem:[#allocation7 + $0x30] sm:$0xff]
    %v245 = vld [vmem:[#allocation7 + $0x38] sm:$0xff]
    %v246 = vld [vmem:[#allocation7 + $0x40] sm:$0xff]
    %v247 = vld [vmem:[#allocation7 + $0x48] sm:$0xff]
    %v248 = vld [vmem:[#allocation7 + $0x50] sm:$0xff]
    %v249 = vld [vmem:[#allocation7 + $0x58] sm:$0xff]
    %v250 = vld [vmem:[#allocation7 + $0x60] sm:$0xff]
    %v251 = vld [vmem:[#allocation7 + $0x68] sm:$0xff]
    %v252 = vld [vmem:[#allocation7 + $0x70] sm:$0xff]
    %v253 = vld [vmem:[#allocation7 + $0x78] sm:$0xff]
    %v254 = vld [vmem:[#allocation7 + $0x80] sm:$0xff]
    %v255 = vld [vmem:[#allocation7 + $0x88] sm:$0xff]
    %v256 = vld [vmem:[#allocation7 + $0x90] sm:$0xff]
    %v257 = vld [vmem:[#allocation7 + $0x98] sm:$0xff]
    %v258 = vld [vmem:[#allocation7 + $0xa0] sm:$0xff]
    %v259 = vld [vmem:[#allocation7 + $0xa8] sm:$0xff]
    %v260 = vld [vmem:[#allocation7 + $0xb0] sm:$0xff]
    %v261 = vld [vmem:[#allocation7 + $0xb8] sm:$0xff]
    %v262 = vld [vmem:[#allocation7 + $0xc0] sm:$0xff]
    %v263 = vld [vmem:[#allocation7 + $0xc8] sm:$0xff]
    %v264 = vld [vmem:[#allocation7 + $0xd0] sm:$0xff]
    %v265 = vld [vmem:[#allocation7 + $0xd8] sm:$0xff]
    %v266 = vld [vmem:[#allocation7 + $0xe0] sm:$0xff]
    %v267 = vld [vmem:[#allocation7 + $0xe8] sm:$0xff]
    %v268 = vld [vmem:[#allocation7 + $0xf0] sm:$0xff]
    %v269 = vld [vmem:[#allocation7 + $0xf8] sm:$0xff]
    %vm270 = vcmask 523264
    %v272 = vsel %vm270, 0.0, 0
    %274 = vmatprep.subr.mxu0 %v239
    %275 = vmatpush1.msra.mxu0 %v238
    %276 = vmatprep.subr.mxu0 %v243
    %277 = vmatpush1.msra.mxu0 %v242
    %278 = vmatprep.subr.mxu0 %v247
    %279 = vmatpush1.msra.mxu0 %v246
    %280 = vmatprep.subr.mxu0 %v251
    %281 = vmatpush1.msra.mxu0 %v250
    %282 = vmatprep.subr.mxu0 %v255
    %283 = vmatpush1.msra.mxu0 %v254
    %284 = vmatprep.subr.mxu0 %v259
    %285 = vmatpush1.msra.mxu0 %v258
    %286 = vmatprep.subr.mxu0 %v263
    %287 = vmatpush1.msra.mxu0 %v262
    %288 = vmatprep.subr.mxu0 %v267
    %289 = vmatpush1.msra.mxu0 %v266
    %290 = vmatprep.subr.mxu0 0.0
    %291 = vmatpush1.msra.mxu0 0.0
    %292 = vmatprep.subr.mxu0 0.0
    %293 = vmatpush1.msra.mxu0 0.0
    %294 = vmatprep.subr.mxu0 0.0
    %295 = vmatpush1.msra.mxu0 0.0
    %296 = vmatprep.subr.mxu0 0.0
    %297 = vmatpush1.msra.mxu0 0.0
    %298 = vmatprep.subr.mxu0 0.0
    %299 = vmatpush1.msra.mxu0 0.0
    %300 = vmatprep.subr.mxu0 0.0
    %301 = vmatpush1.msra.mxu0 0.0
    %302 = vmatprep.subr.mxu0 0.0
    %303 = vmatpush1.msra.mxu0 0.0
    %304 = vmatprep.subr.mxu0 0.0
    %305 = vmatpush1.msra.mxu0 0.0
    %306 = vmatprep.subr.mxu0 0.0
    %307 = vmatpush1.msra.mxu0 0.0
    %308 = vmatprep.subr.mxu0 0.0
    %309 = vmatpush1.msra.mxu0 0.0
    %310 = vmatprep.subr.mxu0 0.0
    %311 = vmatpush1.msra.mxu0 0.0
    %312 = vmatprep.subr.mxu0 0.0
    %313 = vmatpush1.msra.mxu0 0.0
    %314 = vmatprep.subr.mxu0 0.0
    %315 = vmatpush1.msra.mxu0 0.0
    %316 = vmatprep.subr.mxu0 0.0
    %317 = vmatpush1.msra.mxu0 0.0
    %318 = vmatprep.subr.mxu0 0.0
    %319 = vmatpush1.msra.mxu0 0.0
    %320 = vmatprep.subr.mxu0 0.0
    %321 = vmatpush1.msra.mxu0 0.0
    %322 = vmatprep.subr.mxu0 0.0
    %323 = vmatpush1.msra.mxu0 0.0
    %324 = vmatprep.subr.mxu0 0.0
    %325 = vmatpush1.msra.mxu0 0.0
    %326 = vmatprep.subr.mxu0 0.0
    %327 = vmatpush1.msra.mxu0 0.0
    %328 = vmatprep.subr.mxu0 0.0
    %329 = vmatpush1.msra.mxu0 0.0
    %330 = vmatprep.subr.mxu0 0.0
    %331 = vmatpush1.msra.mxu0 0.0
    %332 = vmatprep.subr.mxu0 0.0
    %333 = vmatpush1.msra.mxu0 0.0
    %334 = vmatprep.subr.mxu0 0.0
    %335 = vmatpush1.msra.mxu0 0.0
    %336 = vmatprep.subr.mxu0 0.0
    %337 = vmatpush1.msra.mxu0 0.0
    %338 = vmatprep.mubr.f32.mxu0 0.0
    %339 = vmatmul.mubr.f32.gmra.mrb[0].mxu0 %v272
    %v340 = vpop.f32.mrb[0].mxu0
    %v341 = vadd.f32 0.0, %v340
    %v342 = vpop.f32.mrb[0].mxu0
    %v343 = vadd.f32 0.0, %v342
    %344 = vdwg.mxu0
    %345 = vmatprep.subr.mxu0 %v241
    %346 = vmatpush1.msra.mxu0 %v240
    %347 = vmatprep.subr.mxu0 %v245
    %348 = vmatpush1.msra.mxu0 %v244
    %349 = vmatprep.subr.mxu0 %v249
    %350 = vmatpush1.msra.mxu0 %v248
    %351 = vmatprep.subr.mxu0 %v253
    %352 = vmatpush1.msra.mxu0 %v252
    %353 = vmatprep.subr.mxu0 %v257
    %354 = vmatpush1.msra.mxu0 %v256
    %355 = vmatprep.subr.mxu0 %v261
    %356 = vmatpush1.msra.mxu0 %v260
    %357 = vmatprep.subr.mxu0 %v265
    %358 = vmatpush1.msra.mxu0 %v264
    %359 = vmatprep.subr.mxu0 %v269
    %360 = vmatpush1.msra.mxu0 %v268
    %361 = vmatprep.subr.mxu0 0.0
    %362 = vmatpush1.msra.mxu0 0.0
    %363 = vmatprep.subr.mxu0 0.0
    %364 = vmatpush1.msra.mxu0 0.0
    %365 = vmatprep.subr.mxu0 0.0
    %366 = vmatpush1.msra.mxu0 0.0
    %367 = vmatprep.subr.mxu0 0.0
    %368 = vmatpush1.msra.mxu0 0.0
    %369 = vmatprep.subr.mxu0 0.0
    %370 = vmatpush1.msra.mxu0 0.0
    %371 = vmatprep.subr.mxu0 0.0
    %372 = vmatpush1.msra.mxu0 0.0
    %373 = vmatprep.subr.mxu0 0.0
    %374 = vmatpush1.msra.mxu0 0.0
    %375 = vmatprep.subr.mxu0 0.0
    %376 = vmatpush1.msra.mxu0 0.0
    %377 = vmatprep.subr.mxu0 0.0
    %378 = vmatpush1.msra.mxu0 0.0
    %379 = vmatprep.subr.mxu0 0.0
    %380 = vmatpush1.msra.mxu0 0.0
    %381 = vmatprep.subr.mxu0 0.0
    %382 = vmatpush1.msra.mxu0 0.0
    %383 = vmatprep.subr.mxu0 0.0
    %384 = vmatpush1.msra.mxu0 0.0
    %385 = vmatprep.subr.mxu0 0.0
    %386 = vmatpush1.msra.mxu0 0.0
    %387 = vmatprep.subr.mxu0 0.0
    %388 = vmatpush1.msra.mxu0 0.0
    %389 = vmatprep.subr.mxu0 0.0
    %390 = vmatpush1.msra.mxu0 0.0
    %391 = vmatprep.subr.mxu0 0.0
    %392 = vmatpush1.msra.mxu0 0.0
    %393 = vmatprep.subr.mxu0 0.0
    %394 = vmatpush1.msra.mxu0 0.0
    %395 = vmatprep.subr.mxu0 0.0
    %396 = vmatpush1.msra.mxu0 0.0
    %397 = vmatprep.subr.mxu0 0.0
    %398 = vmatpush1.msra.mxu0 0.0
    %399 = vmatprep.subr.mxu0 0.0
    %400 = vmatpush1.msra.mxu0 0.0
    %401 = vmatprep.subr.mxu0 0.0
    %402 = vmatpush1.msra.mxu0 0.0
    %403 = vmatprep.subr.mxu0 0.0
    %404 = vmatpush1.msra.mxu0 0.0
    %405 = vmatprep.subr.mxu0 0.0
    %406 = vmatpush1.msra.mxu0 0.0
    %407 = vmatprep.subr.mxu0 0.0
    %408 = vmatpush1.msra.mxu0 0.0
    %409 = vmatprep.mubr.f32.mxu0 0.0
    %410 = vmatmul.mubr.f32.gmra.mrb[0].mxu0 %v272
    %v411 = vpop.f32.mrb[0].mxu0
    %v412 = vadd.f32 0.0, %v411
    %v413 = vpop.f32.mrb[0].mxu0
    %v414 = vadd.f32 0.0, %v413
    %415 = vdwg.mxu0
    %v416 = vadd.f32 %v207, %v341
    %v417 = vadd.f32 %v208, %v343
    %v418 = vadd.f32 %v209, %v412
    %v419 = vadd.f32 %v210, %v414
    %v420 = vxor.u32 %v416, 2147483648
    %v421 = vmul.f32 %v420, 1.442695
    %v422 = vpow.pop %v421
    %v423 = vadd.f32 %v422, 1.0
    %v424 = vrcp.pop %v423
    %v425 = vmul.f32 1.0, %v424
    %v426 = vxor.u32 %v417, 2147483648
    %v427 = vmul.f32 %v426, 1.442695
    %v428 = vpow.pop %v427
    %v429 = vadd.f32 %v428, 1.0
    %v430 = vrcp.pop %v429
    %v431 = vmul.f32 1.0, %v430
    %v432 = vtanh.pop %v418
    %v433 = vxor.u32 %v419, 2147483648
    %v434 = vmul.f32 %v433, 1.442695
    %v435 = vpow.pop %v434
    %v436 = vadd.f32 %v435, 1.0
    %v437 = vrcp.pop %v436
    %v438 = vmul.f32 1.0, %v437
    %v439 = vmul.f32 %v431, 0.0
    %v440 = vmul.f32 %v425, %v432
    %v441 = vadd.f32 %v439, %v440
    %v442 = vtanh.pop %v441
    %v443 = vmul.f32 %v438, %v442
    %v445 = vsel %vm270, %v443, 0
    %447 = vmatprep.subr.mxu0 %v239
    %448 = vmatpush1.msra.mxu0 %v238
    %449 = vmatprep.subr.mxu0 %v243
    %450 = vmatpush1.msra.mxu0 %v242
    %451 = vmatprep.subr.mxu0 %v247
    %452 = vmatpush1.msra.mxu0 %v246
    %453 = vmatprep.subr.mxu0 %v251
    %454 = vmatpush1.msra.mxu0 %v250
    %455 = vmatprep.subr.mxu0 %v255
    %456 = vmatpush1.msra.mxu0 %v254
    %457 = vmatprep.subr.mxu0 %v259
    %458 = vmatpush1.msra.mxu0 %v258
    %459 = vmatprep.subr.mxu0 %v263
    %460 = vmatpush1.msra.mxu0 %v262
    %461 = vmatprep.subr.mxu0 %v267
    %462 = vmatpush1.msra.mxu0 %v266
    %463 = vmatprep.subr.mxu0 0.0
    %464 = vmatpush1.msra.mxu0 0.0
    %465 = vmatprep.subr.mxu0 0.0
    %466 = vmatpush1.msra.mxu0 0.0
    %467 = vmatprep.subr.mxu0 0.0
    %468 = vmatpush1.msra.mxu0 0.0
    %469 = vmatprep.subr.mxu0 0.0
    %470 = vmatpush1.msra.mxu0 0.0
    %471 = vmatprep.subr.mxu0 0.0
    %472 = vmatpush1.msra.mxu0 0.0
    %473 = vmatprep.subr.mxu0 0.0
    %474 = vmatpush1.msra.mxu0 0.0
    %475 = vmatprep.subr.mxu0 0.0
    %476 = vmatpush1.msra.mxu0 0.0
    %477 = vmatprep.subr.mxu0 0.0
    %478 = vmatpush1.msra.mxu0 0.0
    %479 = vmatprep.subr.mxu0 0.0
    %480 = vmatpush1.msra.mxu0 0.0
    %481 = vmatprep.subr.mxu0 0.0
    %482 = vmatpush1.msra.mxu0 0.0
    %483 = vmatprep.subr.mxu0 0.0
    %484 = vmatpush1.msra.mxu0 0.0
    %485 = vmatprep.subr.mxu0 0.0
    %486 = vmatpush1.msra.mxu0 0.0
    %487 = vmatprep.subr.mxu0 0.0
    %488 = vmatpush1.msra.mxu0 0.0
    %489 = vmatprep.subr.mxu0 0.0
    %490 = vmatpush1.msra.mxu0 0.0
    %491 = vmatprep.subr.mxu0 0.0
    %492 = vmatpush1.msra.mxu0 0.0
    %493 = vmatprep.subr.mxu0 0.0
    %494 = vmatpush1.msra.mxu0 0.0
    %495 = vmatprep.subr.mxu0 0.0
    %496 = vmatpush1.msra.mxu0 0.0
    %497 = vmatprep.subr.mxu0 0.0
    %498 = vmatpush1.msra.mxu0 0.0
    %499 = vmatprep.subr.mxu0 0.0
    %500 = vmatpush1.msra.mxu0 0.0
    %501 = vmatprep.subr.mxu0 0.0
    %502 = vmatpush1.msra.mxu0 0.0
    %503 = vmatprep.subr.mxu0 0.0
    %504 = vmatpush1.msra.mxu0 0.0
    %505 = vmatprep.subr.mxu0 0.0
    %506 = vmatpush1.msra.mxu0 0.0
    %507 = vmatprep.subr.mxu0 0.0
    %508 = vmatpush1.msra.mxu0 0.0
    %509 = vmatprep.subr.mxu0 0.0
    %510 = vmatpush1.msra.mxu0 0.0
    %511 = vmatprep.mubr.f32.mxu0 0.0
    %512 = vmatmul.mubr.f32.gmra.mrb[0].mxu0 %v445
    %v513 = vpop.f32.mrb[0].mxu0
    %v514 = vadd.f32 0.0, %v513
    %v515 = vpop.f32.mrb[0].mxu0
    %v516 = vadd.f32 0.0, %v515
    %517 = vdwg.mxu0
    %518 = vmatprep.subr.mxu0 %v241
    %519 = vmatpush1.msra.mxu0 %v240
    %520 = vmatprep.subr.mxu0 %v245
    %521 = vmatpush1.msra.mxu0 %v244
    %522 = vmatprep.subr.mxu0 %v249
    %523 = vmatpush1.msra.mxu0 %v248
    %524 = vmatprep.subr.mxu0 %v253
    %525 = vmatpush1.msra.mxu0 %v252
    %526 = vmatprep.subr.mxu0 %v257
    %527 = vmatpush1.msra.mxu0 %v256
    %528 = vmatprep.subr.mxu0 %v261
    %529 = vmatpush1.msra.mxu0 %v260
    %530 = vmatprep.subr.mxu0 %v265
    %531 = vmatpush1.msra.mxu0 %v264
    %532 = vmatprep.subr.mxu0 %v269
    %533 = vmatpush1.msra.mxu0 %v268
    %534 = vmatprep.subr.mxu0 0.0
    %535 = vmatpush1.msra.mxu0 0.0
    %536 = vmatprep.subr.mxu0 0.0
    %537 = vmatpush1.msra.mxu0 0.0
    %538 = vmatprep.subr.mxu0 0.0
    %539 = vmatpush1.msra.mxu0 0.0
    %540 = vmatprep.subr.mxu0 0.0
    %541 = vmatpush1.msra.mxu0 0.0
    %542 = vmatprep.subr.mxu0 0.0
    %543 = vmatpush1.msra.mxu0 0.0
    %544 = vmatprep.subr.mxu0 0.0
    %545 = vmatpush1.msra.mxu0 0.0
    %546 = vmatprep.subr.mxu0 0.0
    %547 = vmatpush1.msra.mxu0 0.0
    %548 = vmatprep.subr.mxu0 0.0
    %549 = vmatpush1.msra.mxu0 0.0
    %550 = vmatprep.subr.mxu0 0.0
    %551 = vmatpush1.msra.mxu0 0.0
    %552 = vmatprep.subr.mxu0 0.0
    %553 = vmatpush1.msra.mxu0 0.0
    %554 = vmatprep.subr.mxu0 0.0
    %555 = vmatpush1.msra.mxu0 0.0
    %556 = vmatprep.subr.mxu0 0.0
    %557 = vmatpush1.msra.mxu0 0.0
    %558 = vmatprep.subr.mxu0 0.0
    %559 = vmatpush1.msra.mxu0 0.0
    %560 = vmatprep.subr.mxu0 0.0
    %561 = vmatpush1.msra.mxu0 0.0
    %562 = vmatprep.subr.mxu0 0.0
    %563 = vmatpush1.msra.mxu0 0.0
    %564 = vmatprep.subr.mxu0 0.0
    %565 = vmatpush1.msra.mxu0 0.0
    %566 = vmatprep.subr.mxu0 0.0
    %567 = vmatpush1.msra.mxu0 0.0
    %568 = vmatprep.subr.mxu0 0.0
    %569 = vmatpush1.msra.mxu0 0.0
    %570 = vmatprep.subr.mxu0 0.0
    %571 = vmatpush1.msra.mxu0 0.0
    %572 = vmatprep.subr.mxu0 0.0
    %573 = vmatpush1.msra.mxu0 0.0
    %574 = vmatprep.subr.mxu0 0.0
    %575 = vmatpush1.msra.mxu0 0.0
    %576 = vmatprep.subr.mxu0 0.0
    %577 = vmatpush1.msra.mxu0 0.0
    %578 = vmatprep.subr.mxu0 0.0
    %579 = vmatpush1.msra.mxu0 0.0
    %580 = vmatprep.subr.mxu0 0.0
    %581 = vmatpush1.msra.mxu0 0.0
    %582 = vmatprep.mubr.f32.mxu0 0.0
    %583 = vmatmul.mubr.f32.gmra.mrb[0].mxu0 %v445
    %v584 = vpop.f32.mrb[0].mxu0
    %v585 = vadd.f32 0.0, %v584
    %v586 = vpop.f32.mrb[0].mxu0
    %v587 = vadd.f32 0.0, %v586
    %588 = vdwg.mxu0
    %v589 = vadd.f32 %v211, %v514
    %v590 = vadd.f32 %v212, %v516
    %v591 = vadd.f32 %v213, %v585
    %v592 = vadd.f32 %v214, %v587
    %v593 = vxor.u32 %v589, 2147483648
    %v594 = vmul.f32 %v593, 1.442695
    %v595 = vpow.pop %v594
    %v596 = vadd.f32 %v595, 1.0
    %v597 = vrcp.pop %v596
    %v598 = vmul.f32 1.0, %v597
    %v599 = vxor.u32 %v590, 2147483648
    %v600 = vmul.f32 %v599, 1.442695
    %v601 = vpow.pop %v600
    %v602 = vadd.f32 %v601, 1.0
    %v603 = vrcp.pop %v602
    %v604 = vmul.f32 1.0, %v603
    %v605 = vtanh.pop %v591
    %v606 = vxor.u32 %v592, 2147483648
    %v607 = vmul.f32 %v606, 1.442695
    %v608 = vpow.pop %v607
    %v609 = vadd.f32 %v608, 1.0
    %v610 = vrcp.pop %v609
    %v611 = vmul.f32 1.0, %v610
    %v612 = vmul.f32 %v604, %v441
    %v613 = vmul.f32 %v598, %v605
    %v614 = vadd.f32 %v612, %v613
    %v615 = vtanh.pop %v614
    %v616 = vmul.f32 %v611, %v615
    %v618 = vsel %vm270, %v616, 0
    %620 = vmatprep.subr.mxu0 %v239
    %621 = vmatpush1.msra.mxu0 %v238
    %622 = vmatprep.subr.mxu0 %v243
    %623 = vmatpush1.msra.mxu0 %v242
    %624 = vmatprep.subr.mxu0 %v247
    %625 = vmatpush1.msra.mxu0 %v246
    %626 = vmatprep.subr.mxu0 %v251
    %627 = vmatpush1.msra.mxu0 %v250
    %628 = vmatprep.subr.mxu0 %v255
    %629 = vmatpush1.msra.mxu0 %v254
    %630 = vmatprep.subr.mxu0 %v259
    %631 = vmatpush1.msra.mxu0 %v258
    %632 = vmatprep.subr.mxu0 %v263
    %633 = vmatpush1.msra.mxu0 %v262
    %634 = vmatprep.subr.mxu0 %v267
    %635 = vmatpush1.msra.mxu0 %v266
    %636 = vmatprep.subr.mxu0 0.0
    %637 = vmatpush1.msra.mxu0 0.0
    %638 = vmatprep.subr.mxu0 0.0
    %639 = vmatpush1.msra.mxu0 0.0
    %640 = vmatprep.subr.mxu0 0.0
    %641 = vmatpush1.msra.mxu0 0.0
    %642 = vmatprep.subr.mxu0 0.0
    %643 = vmatpush1.msra.mxu0 0.0
    %644 = vmatprep.subr.mxu0 0.0
    %645 = vmatpush1.msra.mxu0 0.0
    %646 = vmatprep.subr.mxu0 0.0
    %647 = vmatpush1.msra.mxu0 0.0
    %648 = vmatprep.subr.mxu0 0.0
    %649 = vmatpush1.msra.mxu0 0.0
    %650 = vmatprep.subr.mxu0 0.0
    %651 = vmatpush1.msra.mxu0 0.0
    %652 = vmatprep.subr.mxu0 0.0
    %653 = vmatpush1.msra.mxu0 0.0
    %654 = vmatprep.subr.mxu0 0.0
    %655 = vmatpush1.msra.mxu0 0.0
    %656 = vmatprep.subr.mxu0 0.0
    %657 = vmatpush1.msra.mxu0 0.0
    %658 = vmatprep.subr.mxu0 0.0
    %659 = vmatpush1.msra.mxu0 0.0
    %660 = vmatprep.subr.mxu0 0.0
    %661 = vmatpush1.msra.mxu0 0.0
    %662 = vmatprep.subr.mxu0 0.0
    %663 = vmatpush1.msra.mxu0 0.0
    %664 = vmatprep.subr.mxu0 0.0
    %665 = vmatpush1.msra.mxu0 0.0
    %666 = vmatprep.subr.mxu0 0.0
    %667 = vmatpush1.msra.mxu0 0.0
    %668 = vmatprep.subr.mxu0 0.0
    %669 = vmatpush1.msra.mxu0 0.0
    %670 = vmatprep.subr.mxu0 0.0
    %671 = vmatpush1.msra.mxu0 0.0
    %672 = vmatprep.subr.mxu0 0.0
    %673 = vmatpush1.msra.mxu0 0.0
    %674 = vmatprep.subr.mxu0 0.0
    %675 = vmatpush1.msra.mxu0 0.0
    %676 = vmatprep.subr.mxu0 0.0
    %677 = vmatpush1.msra.mxu0 0.0
    %678 = vmatprep.subr.mxu0 0.0
    %679 = vmatpush1.msra.mxu0 0.0
    %680 = vmatprep.subr.mxu0 0.0
    %681 = vmatpush1.msra.mxu0 0.0
    %682 = vmatprep.subr.mxu0 0.0
    %683 = vmatpush1.msra.mxu0 0.0
    %684 = vmatprep.mubr.f32.mxu0 0.0
    %685 = vmatmul.mubr.f32.gmra.mrb[0].mxu0 %v618
    %v686 = vpop.f32.mrb[0].mxu0
    %v687 = vadd.f32 0.0, %v686
    %v688 = vpop.f32.mrb[0].mxu0
    %v689 = vadd.f32 0.0, %v688
    %690 = vdwg.mxu0
    %691 = vmatprep.subr.mxu0 %v241
    %692 = vmatpush1.msra.mxu0 %v240
    %693 = vmatprep.subr.mxu0 %v245
    %694 = vmatpush1.msra.mxu0 %v244
    %695 = vmatprep.subr.mxu0 %v249
    %696 = vmatpush1.msra.mxu0 %v248
    %697 = vmatprep.subr.mxu0 %v253
    %698 = vmatpush1.msra.mxu0 %v252
    %699 = vmatprep.subr.mxu0 %v257
    %700 = vmatpush1.msra.mxu0 %v256
    %701 = vmatprep.subr.mxu0 %v261
    %702 = vmatpush1.msra.mxu0 %v260
    %703 = vmatprep.subr.mxu0 %v265
    %704 = vmatpush1.msra.mxu0 %v264
    %705 = vmatprep.subr.mxu0 %v269
    %706 = vmatpush1.msra.mxu0 %v268
    %707 = vmatprep.subr.mxu0 0.0
    %708 = vmatpush1.msra.mxu0 0.0
    %709 = vmatprep.subr.mxu0 0.0
    %710 = vmatpush1.msra.mxu0 0.0
    %711 = vmatprep.subr.mxu0 0.0
    %712 = vmatpush1.msra.mxu0 0.0
    %713 = vmatprep.subr.mxu0 0.0
    %714 = vmatpush1.msra.mxu0 0.0
    %715 = vmatprep.subr.mxu0 0.0
    %716 = vmatpush1.msra.mxu0 0.0
    %717 = vmatprep.subr.mxu0 0.0
    %718 = vmatpush1.msra.mxu0 0.0
    %719 = vmatprep.subr.mxu0 0.0
    %720 = vmatpush1.msra.mxu0 0.0
    %721 = vmatprep.subr.mxu0 0.0
    %722 = vmatpush1.msra.mxu0 0.0
    %723 = vmatprep.subr.mxu0 0.0
    %724 = vmatpush1.msra.mxu0 0.0
    %725 = vmatprep.subr.mxu0 0.0
    %726 = vmatpush1.msra.mxu0 0.0
    %727 = vmatprep.subr.mxu0 0.0
    %728 = vmatpush1.msra.mxu0 0.0
    %729 = vmatprep.subr.mxu0 0.0
    %730 = vmatpush1.msra.mxu0 0.0
    %731 = vmatprep.subr.mxu0 0.0
    %732 = vmatpush1.msra.mxu0 0.0
    %733 = vmatprep.subr.mxu0 0.0
    %734 = vmatpush1.msra.mxu0 0.0
    %735 = vmatprep.subr.mxu0 0.0
    %736 = vmatpush1.msra.mxu0 0.0
    %737 = vmatprep.subr.mxu0 0.0
    %738 = vmatpush1.msra.mxu0 0.0
    %739 = vmatprep.subr.mxu0 0.0
    %740 = vmatpush1.msra.mxu0 0.0
    %741 = vmatprep.subr.mxu0 0.0
    %742 = vmatpush1.msra.mxu0 0.0
    %743 = vmatprep.subr.mxu0 0.0
    %744 = vmatpush1.msra.mxu0 0.0
    %745 = vmatprep.subr.mxu0 0.0
    %746 = vmatpush1.msra.mxu0 0.0
    %747 = vmatprep.subr.mxu0 0.0
    %748 = vmatpush1.msra.mxu0 0.0
    %749 = vmatprep.subr.mxu0 0.0
    %750 = vmatpush1.msra.mxu0 0.0
    %751 = vmatprep.subr.mxu0 0.0
    %752 = vmatpush1.msra.mxu0 0.0
    %753 = vmatprep.subr.mxu0 0.0
    %754 = vmatpush1.msra.mxu0 0.0
    %755 = vmatprep.mubr.f32.mxu0 0.0
    %756 = vmatmul.mubr.f32.gmra.mrb[0].mxu0 %v618
    %v757 = vpop.f32.mrb[0].mxu0
    %v758 = vadd.f32 0.0, %v757
    %v759 = vpop.f32.mrb[0].mxu0
    %v760 = vadd.f32 0.0, %v759
    %761 = vdwg.mxu0
    %v762 = vadd.f32 %v215, %v687
    %v763 = vadd.f32 %v216, %v689
    %v764 = vadd.f32 %v217, %v758
    %v765 = vadd.f32 %v218, %v760
    %v766 = vxor.u32 %v762, 2147483648
    %v767 = vmul.f32 %v766, 1.442695
    %v768 = vpow.pop %v767
    %v769 = vadd.f32 %v768, 1.0
    %v770 = vrcp.pop %v769
    %v771 = vmul.f32 1.0, %v770
    %v772 = vxor.u32 %v763, 2147483648
    %v773 = vmul.f32 %v772, 1.442695
    %v774 = vpow.pop %v773
    %v775 = vadd.f32 %v774, 1.0
    %v776 = vrcp.pop %v775
    %v777 = vmul.f32 1.0, %v776
    %v778 = vtanh.pop %v764
    %v779 = vxor.u32 %v765, 2147483648
    %v780 = vmul.f32 %v779, 1.442695
    %v781 = vpow.pop %v780
    %v782 = vadd.f32 %v781, 1.0
    %v783 = vrcp.pop %v782
    %v784 = vmul.f32 1.0, %v783
    %v785 = vmul.f32 %v777, %v614
    %v786 = vmul.f32 %v771, %v778
    %v787 = vadd.f32 %v785, %v786
    %v788 = vtanh.pop %v787
    %v789 = vmul.f32 %v784, %v788
    %v791 = vsel %vm270, %v789, 0
    %793 = vmatprep.subr.mxu0 %v239
    %794 = vmatpush1.msra.mxu0 %v238
    %795 = vmatprep.subr.mxu0 %v243
    %796 = vmatpush1.msra.mxu0 %v242
    %797 = vmatprep.subr.mxu0 %v247
    %798 = vmatpush1.msra.mxu0 %v246
    %799 = vmatprep.subr.mxu0 %v251
    %800 = vmatpush1.msra.mxu0 %v250
    %801 = vmatprep.subr.mxu0 %v255
    %802 = vmatpush1.msra.mxu0 %v254
    %803 = vmatprep.subr.mxu0 %v259
    %804 = vmatpush1.msra.mxu0 %v258
    %805 = vmatprep.subr.mxu0 %v263
    %806 = vmatpush1.msra.mxu0 %v262
    %807 = vmatprep.subr.mxu0 %v267
    %808 = vmatpush1.msra.mxu0 %v266
    %809 = vmatprep.subr.mxu0 0.0
    %810 = vmatpush1.msra.mxu0 0.0
    %811 = vmatprep.subr.mxu0 0.0
    %812 = vmatpush1.msra.mxu0 0.0
    %813 = vmatprep.subr.mxu0 0.0
    %814 = vmatpush1.msra.mxu0 0.0
    %815 = vmatprep.subr.mxu0 0.0
    %816 = vmatpush1.msra.mxu0 0.0
    %817 = vmatprep.subr.mxu0 0.0
    %818 = vmatpush1.msra.mxu0 0.0
    %819 = vmatprep.subr.mxu0 0.0
    %820 = vmatpush1.msra.mxu0 0.0
    %821 = vmatprep.subr.mxu0 0.0
    %822 = vmatpush1.msra.mxu0 0.0
    %823 = vmatprep.subr.mxu0 0.0
    %824 = vmatpush1.msra.mxu0 0.0
    %825 = vmatprep.subr.mxu0 0.0
    %826 = vmatpush1.msra.mxu0 0.0
    %827 = vmatprep.subr.mxu0 0.0
    %828 = vmatpush1.msra.mxu0 0.0
    %829 = vmatprep.subr.mxu0 0.0
    %830 = vmatpush1.msra.mxu0 0.0
    %831 = vmatprep.subr.mxu0 0.0
    %832 = vmatpush1.msra.mxu0 0.0
    %833 = vmatprep.subr.mxu0 0.0
    %834 = vmatpush1.msra.mxu0 0.0
    %835 = vmatprep.subr.mxu0 0.0
    %836 = vmatpush1.msra.mxu0 0.0
    %837 = vmatprep.subr.mxu0 0.0
    %838 = vmatpush1.msra.mxu0 0.0
    %839 = vmatprep.subr.mxu0 0.0
    %840 = vmatpush1.msra.mxu0 0.0
    %841 = vmatprep.subr.mxu0 0.0
    %842 = vmatpush1.msra.mxu0 0.0
    %843 = vmatprep.subr.mxu0 0.0
    %844 = vmatpush1.msra.mxu0 0.0
    %845 = vmatprep.subr.mxu0 0.0
    %846 = vmatpush1.msra.mxu0 0.0
    %847 = vmatprep.subr.mxu0 0.0
    %848 = vmatpush1.msra.mxu0 0.0
    %849 = vmatprep.subr.mxu0 0.0
    %850 = vmatpush1.msra.mxu0 0.0
    %851 = vmatprep.subr.mxu0 0.0
    %852 = vmatpush1.msra.mxu0 0.0
    %853 = vmatprep.subr.mxu0 0.0
    %854 = vmatpush1.msra.mxu0 0.0
    %855 = vmatprep.subr.mxu0 0.0
    %856 = vmatpush1.msra.mxu0 0.0
    %857 = vmatprep.mubr.f32.mxu0 0.0
    %858 = vmatmul.mubr.f32.gmra.mrb[0].mxu0 %v791
    %v859 = vpop.f32.mrb[0].mxu0
    %v860 = vadd.f32 0.0, %v859
    %v861 = vpop.f32.mrb[0].mxu0
    %v862 = vadd.f32 0.0, %v861
    %863 = vdwg.mxu0
    %864 = vmatprep.subr.mxu0 %v241
    %865 = vmatpush1.msra.mxu0 %v240
    %866 = vmatprep.subr.mxu0 %v245
    %867 = vmatpush1.msra.mxu0 %v244
    %868 = vmatprep.subr.mxu0 %v249
    %869 = vmatpush1.msra.mxu0 %v248
    %870 = vmatprep.subr.mxu0 %v253
    %871 = vmatpush1.msra.mxu0 %v252
    %872 = vmatprep.subr.mxu0 %v257
    %873 = vmatpush1.msra.mxu0 %v256
    %874 = vmatprep.subr.mxu0 %v261
    %875 = vmatpush1.msra.mxu0 %v260
    %876 = vmatprep.subr.mxu0 %v265
    %877 = vmatpush1.msra.mxu0 %v264
    %878 = vmatprep.subr.mxu0 %v269
    %879 = vmatpush1.msra.mxu0 %v268
    %880 = vmatprep.subr.mxu0 0.0
    %881 = vmatpush1.msra.mxu0 0.0
    %882 = vmatprep.subr.mxu0 0.0
    %883 = vmatpush1.msra.mxu0 0.0
    %884 = vmatprep.subr.mxu0 0.0
    %885 = vmatpush1.msra.mxu0 0.0
    %886 = vmatprep.subr.mxu0 0.0
    %887 = vmatpush1.msra.mxu0 0.0
    %888 = vmatprep.subr.mxu0 0.0
    %889 = vmatpush1.msra.mxu0 0.0
    %890 = vmatprep.subr.mxu0 0.0
    %891 = vmatpush1.msra.mxu0 0.0
    %892 = vmatprep.subr.mxu0 0.0
    %893 = vmatpush1.msra.mxu0 0.0
    %894 = vmatprep.subr.mxu0 0.0
    %895 = vmatpush1.msra.mxu0 0.0
    %896 = vmatprep.subr.mxu0 0.0
    %897 = vmatpush1.msra.mxu0 0.0
    %898 = vmatprep.subr.mxu0 0.0
    %899 = vmatpush1.msra.mxu0 0.0
    %900 = vmatprep.subr.mxu0 0.0
    %901 = vmatpush1.msra.mxu0 0.0
    %902 = vmatprep.subr.mxu0 0.0
    %903 = vmatpush1.msra.mxu0 0.0
    %904 = vmatprep.subr.mxu0 0.0
    %905 = vmatpush1.msra.mxu0 0.0
    %906 = vmatprep.subr.mxu0 0.0
    %907 = vmatpush1.msra.mxu0 0.0
    %908 = vmatprep.subr.mxu0 0.0
    %909 = vmatpush1.msra.mxu0 0.0
    %910 = vmatprep.subr.mxu0 0.0
    %911 = vmatpush1.msra.mxu0 0.0
    %912 = vmatprep.subr.mxu0 0.0
    %913 = vmatpush1.msra.mxu0 0.0
    %914 = vmatprep.subr.mxu0 0.0
    %915 = vmatpush1.msra.mxu0 0.0
    %916 = vmatprep.subr.mxu0 0.0
    %917 = vmatpush1.msra.mxu0 0.0
    %918 = vmatprep.subr.mxu0 0.0
    %919 = vmatpush1.msra.mxu0 0.0
    %920 = vmatprep.subr.mxu0 0.0
    %921 = vmatpush1.msra.mxu0 0.0
    %922 = vmatprep.subr.mxu0 0.0
    %923 = vmatpush1.msra.mxu0 0.0
    %924 = vmatprep.subr.mxu0 0.0
    %925 = vmatpush1.msra.mxu0 0.0
    %926 = vmatprep.subr.mxu0 0.0
    %927 = vmatpush1.msra.mxu0 0.0
    %928 = vmatprep.mubr.f32.mxu0 0.0
    %929 = vmatmul.mubr.f32.gmra.mrb[0].mxu0 %v791
    %v930 = vpop.f32.mrb[0].mxu0
    %v931 = vadd.f32 0.0, %v930
    %v932 = vpop.f32.mrb[0].mxu0
    %v933 = vadd.f32 0.0, %v932
    %934 = vdwg.mxu0
    %v935 = vadd.f32 %v219, %v860
    %v936 = vadd.f32 %v220, %v862
    %v937 = vadd.f32 %v221, %v931
    %v938 = vadd.f32 %v222, %v933
    %v939 = vxor.u32 %v935, 2147483648
    %v940 = vmul.f32 %v939, 1.442695
    %v941 = vpow.pop %v940
    %v942 = vadd.f32 %v941, 1.0
    %v943 = vrcp.pop %v942
    %v944 = vmul.f32 1.0, %v943
    %v945 = vxor.u32 %v936, 2147483648
    %v946 = vmul.f32 %v945, 1.442695
    %v947 = vpow.pop %v946
    %v948 = vadd.f32 %v947, 1.0
    %v949 = vrcp.pop %v948
    %v950 = vmul.f32 1.0, %v949
    %v951 = vtanh.pop %v937
    %v952 = vxor.u32 %v938, 2147483648
    %v953 = vmul.f32 %v952, 1.442695
    %v954 = vpow.pop %v953
    %v955 = vadd.f32 %v954, 1.0
    %v956 = vrcp.pop %v955
    %v957 = vmul.f32 1.0, %v956
    %v958 = vmul.f32 %v950, %v787
    %v959 = vmul.f32 %v944, %v951
    %v960 = vadd.f32 %v958, %v959
    %v961 = vtanh.pop %v960
    %v962 = vmul.f32 %v957, %v961
    %v964 = vsel %vm270, %v962, 0
    %966 = vmatprep.subr.mxu0 %v239
    %967 = vmatpush1.msra.mxu0 %v238
    %968 = vmatprep.subr.mxu0 %v243
    %969 = vmatpush1.msra.mxu0 %v242
    %970 = vmatprep.subr.mxu0 %v247
    %971 = vmatpush1.msra.mxu0 %v246
    %972 = vmatprep.subr.mxu0 %v251
    %973 = vmatpush1.msra.mxu0 %v250
    %974 = vmatprep.subr.mxu0 %v255
    %975 = vmatpush1.msra.mxu0 %v254
    %976 = vmatprep.subr.mxu0 %v259
    %977 = vmatpush1.msra.mxu0 %v258
    %978 = vmatprep.subr.mxu0 %v263
    %979 = vmatpush1.msra.mxu0 %v262
    %980 = vmatprep.subr.mxu0 %v267
    %981 = vmatpush1.msra.mxu0 %v266
    %982 = vmatprep.subr.mxu0 0.0
    %983 = vmatpush1.msra.mxu0 0.0
    %984 = vmatprep.subr.mxu0 0.0
    %985 = vmatpush1.msra.mxu0 0.0
    %986 = vmatprep.subr.mxu0 0.0
    %987 = vmatpush1.msra.mxu0 0.0
    %988 = vmatprep.subr.mxu0 0.0
    %989 = vmatpush1.msra.mxu0 0.0
    %990 = vmatprep.subr.mxu0 0.0
    %991 = vmatpush1.msra.mxu0 0.0
    %992 = vmatprep.subr.mxu0 0.0
    %993 = vmatpush1.msra.mxu0 0.0
    %994 = vmatprep.subr.mxu0 0.0
    %995 = vmatpush1.msra.mxu0 0.0
    %996 = vmatprep.subr.mxu0 0.0
    %997 = vmatpush1.msra.mxu0 0.0
    %998 = vmatprep.subr.mxu0 0.0
    %999 = vmatpush1.msra.mxu0 0.0
    %1000 = vmatprep.subr.mxu0 0.0
    %1001 = vmatpush1.msra.mxu0 0.0
    %1002 = vmatprep.subr.mxu0 0.0
    %1003 = vmatpush1.msra.mxu0 0.0
    %1004 = vmatprep.subr.mxu0 0.0
    %1005 = vmatpush1.msra.mxu0 0.0
    %1006 = vmatprep.subr.mxu0 0.0
    %1007 = vmatpush1.msra.mxu0 0.0
    %1008 = vmatprep.subr.mxu0 0.0
    %1009 = vmatpush1.msra.mxu0 0.0
    %1010 = vmatprep.subr.mxu0 0.0
    %1011 = vmatpush1.msra.mxu0 0.0
    %1012 = vmatprep.subr.mxu0 0.0
    %1013 = vmatpush1.msra.mxu0 0.0
    %1014 = vmatprep.subr.mxu0 0.0
    %1015 = vmatpush1.msra.mxu0 0.0
    %1016 = vmatprep.subr.mxu0 0.0
    %1017 = vmatpush1.msra.mxu0 0.0
    %1018 = vmatprep.subr.mxu0 0.0
    %1019 = vmatpush1.msra.mxu0 0.0
    %1020 = vmatprep.subr.mxu0 0.0
    %1021 = vmatpush1.msra.mxu0 0.0
    %1022 = vmatprep.subr.mxu0 0.0
    %1023 = vmatpush1.msra.mxu0 0.0
    %1024 = vmatprep.subr.mxu0 0.0
    %1025 = vmatpush1.msra.mxu0 0.0
    %1026 = vmatprep.subr.mxu0 0.0
    %1027 = vmatpush1.msra.mxu0 0.0
    %1028 = vmatprep.subr.mxu0 0.0
    %1029 = vmatpush1.msra.mxu0 0.0
    %1030 = vmatprep.mubr.f32.mxu0 0.0
    %1031 = vmatmul.mubr.f32.gmra.mrb[0].mxu0 %v964
    %v1032 = vpop.f32.mrb[0].mxu0
    %v1033 = vadd.f32 0.0, %v1032
    %v1034 = vpop.f32.mrb[0].mxu0
    %v1035 = vadd.f32 0.0, %v1034
    %1036 = vdwg.mxu0
    %1037 = vmatprep.subr.mxu0 %v241
    %1038 = vmatpush1.msra.mxu0 %v240
    %1039 = vmatprep.subr.mxu0 %v245
    %1040 = vmatpush1.msra.mxu0 %v244
    %1041 = vmatprep.subr.mxu0 %v249
    %1042 = vmatpush1.msra.mxu0 %v248
    %1043 = vmatprep.subr.mxu0 %v253
    %1044 = vmatpush1.msra.mxu0 %v252
    %1045 = vmatprep.subr.mxu0 %v257
    %1046 = vmatpush1.msra.mxu0 %v256
    %1047 = vmatprep.subr.mxu0 %v261
    %1048 = vmatpush1.msra.mxu0 %v260
    %1049 = vmatprep.subr.mxu0 %v265
    %1050 = vmatpush1.msra.mxu0 %v264
    %1051 = vmatprep.subr.mxu0 %v269
    %1052 = vmatpush1.msra.mxu0 %v268
    %1053 = vmatprep.subr.mxu0 0.0
    %1054 = vmatpush1.msra.mxu0 0.0
    %1055 = vmatprep.subr.mxu0 0.0
    %1056 = vmatpush1.msra.mxu0 0.0
    %1057 = vmatprep.subr.mxu0 0.0
    %1058 = vmatpush1.msra.mxu0 0.0
    %1059 = vmatprep.subr.mxu0 0.0
    %1060 = vmatpush1.msra.mxu0 0.0
    %1061 = vmatprep.subr.mxu0 0.0
    %1062 = vmatpush1.msra.mxu0 0.0
    %1063 = vmatprep.subr.mxu0 0.0
    %1064 = vmatpush1.msra.mxu0 0.0
    %1065 = vmatprep.subr.mxu0 0.0
    %1066 = vmatpush1.msra.mxu0 0.0
    %1067 = vmatprep.subr.mxu0 0.0
    %1068 = vmatpush1.msra.mxu0 0.0
    %1069 = vmatprep.subr.mxu0 0.0
    %1070 = vmatpush1.msra.mxu0 0.0
    %1071 = vmatprep.subr.mxu0 0.0
    %1072 = vmatpush1.msra.mxu0 0.0
    %1073 = vmatprep.subr.mxu0 0.0
    %1074 = vmatpush1.msra.mxu0 0.0
    %1075 = vmatprep.subr.mxu0 0.0
    %1076 = vmatpush1.msra.mxu0 0.0
    %1077 = vmatprep.subr.mxu0 0.0
    %1078 = vmatpush1.msra.mxu0 0.0
    %1079 = vmatprep.subr.mxu0 0.0
    %1080 = vmatpush1.msra.mxu0 0.0
    %1081 = vmatprep.subr.mxu0 0.0
    %1082 = vmatpush1.msra.mxu0 0.0
    %1083 = vmatprep.subr.mxu0 0.0
    %1084 = vmatpush1.msra.mxu0 0.0
    %1085 = vmatprep.subr.mxu0 0.0
    %1086 = vmatpush1.msra.mxu0 0.0
    %1087 = vmatprep.subr.mxu0 0.0
    %1088 = vmatpush1.msra.mxu0 0.0
    %1089 = vmatprep.subr.mxu0 0.0
    %1090 = vmatpush1.msra.mxu0 0.0
    %1091 = vmatprep.subr.mxu0 0.0
    %1092 = vmatpush1.msra.mxu0 0.0
    %1093 = vmatprep.subr.mxu0 0.0
    %1094 = vmatpush1.msra.mxu0 0.0
    %1095 = vmatprep.subr.mxu0 0.0
    %1096 = vmatpush1.msra.mxu0 0.0
    %1097 = vmatprep.subr.mxu0 0.0
    %1098 = vmatpush1.msra.mxu0 0.0
    %1099 = vmatprep.subr.mxu0 0.0
    %1100 = vmatpush1.msra.mxu0 0.0
    %1101 = vmatprep.mubr.f32.mxu0 0.0
    %1102 = vmatmul.mubr.f32.gmra.mrb[0].mxu0 %v964
    %v1103 = vpop.f32.mrb[0].mxu0
    %v1104 = vadd.f32 0.0, %v1103
    %v1105 = vpop.f32.mrb[0].mxu0
    %v1106 = vadd.f32 0.0, %v1105
    %1107 = vdwg.mxu0
    %v1108 = vadd.f32 %v223, %v1033
    %v1109 = vadd.f32 %v224, %v1035
    %v1110 = vadd.f32 %v225, %v1104
    %v1111 = vadd.f32 %v226, %v1106
    %v1112 = vxor.u32 %v1108, 2147483648
    %v1113 = vmul.f32 %v1112, 1.442695
    %v1114 = vpow.pop %v1113
    %v1115 = vadd.f32 %v1114, 1.0
    %v1116 = vrcp.pop %v1115
    %v1117 = vmul.f32 1.0, %v1116
    %v1118 = vxor.u32 %v1109, 2147483648
    %v1119 = vmul.f32 %v1118, 1.442695
    %v1120 = vpow.pop %v1119
    %v1121 = vadd.f32 %v1120, 1.0
    %v1122 = vrcp.pop %v1121
    %v1123 = vmul.f32 1.0, %v1122
    %v1124 = vtanh.pop %v1110
    %v1125 = vxor.u32 %v1111, 2147483648
    %v1126 = vmul.f32 %v1125, 1.442695
    %v1127 = vpow.pop %v1126
    %v1128 = vadd.f32 %v1127, 1.0
    %v1129 = vrcp.pop %v1128
    %v1130 = vmul.f32 1.0, %v1129
    %v1131 = vmul.f32 %v1123, %v960
    %v1132 = vmul.f32 %v1117, %v1124
    %v1133 = vadd.f32 %v1131, %v1132
    %v1134 = vtanh.pop %v1133
    %v1135 = vmul.f32 %v1130, %v1134
    %v1137 = vsel %vm270, %v1135, 0
    %1139 = vmatprep.subr.mxu0 %v239
    %1140 = vmatpush1.msra.mxu0 %v238
    %1141 = vmatprep.subr.mxu0 %v243
    %1142 = vmatpush1.msra.mxu0 %v242
    %1143 = vmatprep.subr.mxu0 %v247
    %1144 = vmatpush1.msra.mxu0 %v246
    %1145 = vmatprep.subr.mxu0 %v251
    %1146 = vmatpush1.msra.mxu0 %v250
    %1147 = vmatprep.subr.mxu0 %v255
    %1148 = vmatpush1.msra.mxu0 %v254
    %1149 = vmatprep.subr.mxu0 %v259
    %1150 = vmatpush1.msra.mxu0 %v258
    %1151 = vmatprep.subr.mxu0 %v263
    %1152 = vmatpush1.msra.mxu0 %v262
    %1153 = vmatprep.subr.mxu0 %v267
    %1154 = vmatpush1.msra.mxu0 %v266
    %1155 = vmatprep.subr.mxu0 0.0
    %1156 = vmatpush1.msra.mxu0 0.0
    %1157 = vmatprep.subr.mxu0 0.0
    %1158 = vmatpush1.msra.mxu0 0.0
    %1159 = vmatprep.subr.mxu0 0.0
    %1160 = vmatpush1.msra.mxu0 0.0
    %1161 = vmatprep.subr.mxu0 0.0
    %1162 = vmatpush1.msra.mxu0 0.0
    %1163 = vmatprep.subr.mxu0 0.0
    %1164 = vmatpush1.msra.mxu0 0.0
    %1165 = vmatprep.subr.mxu0 0.0
    %1166 = vmatpush1.msra.mxu0 0.0
    %1167 = vmatprep.subr.mxu0 0.0
    %1168 = vmatpush1.msra.mxu0 0.0
    %1169 = vmatprep.subr.mxu0 0.0
    %1170 = vmatpush1.msra.mxu0 0.0
    %1171 = vmatprep.subr.mxu0 0.0
    %1172 = vmatpush1.msra.mxu0 0.0
    %1173 = vmatprep.subr.mxu0 0.0
    %1174 = vmatpush1.msra.mxu0 0.0
    %1175 = vmatprep.subr.mxu0 0.0
    %1176 = vmatpush1.msra.mxu0 0.0
    %1177 = vmatprep.subr.mxu0 0.0
    %1178 = vmatpush1.msra.mxu0 0.0
    %1179 = vmatprep.subr.mxu0 0.0
    %1180 = vmatpush1.msra.mxu0 0.0
    %1181 = vmatprep.subr.mxu0 0.0
    %1182 = vmatpush1.msra.mxu0 0.0
    %1183 = vmatprep.subr.mxu0 0.0
    %1184 = vmatpush1.msra.mxu0 0.0
    %1185 = vmatprep.subr.mxu0 0.0
    %1186 = vmatpush1.msra.mxu0 0.0
    %1187 = vmatprep.subr.mxu0 0.0
    %1188 = vmatpush1.msra.mxu0 0.0
    %1189 = vmatprep.subr.mxu0 0.0
    %1190 = vmatpush1.msra.mxu0 0.0
    %1191 = vmatprep.subr.mxu0 0.0
    %1192 = vmatpush1.msra.mxu0 0.0
    %1193 = vmatprep.subr.mxu0 0.0
    %1194 = vmatpush1.msra.mxu0 0.0
    %1195 = vmatprep.subr.mxu0 0.0
    %1196 = vmatpush1.msra.mxu0 0.0
    %1197 = vmatprep.subr.mxu0 0.0
    %1198 = vmatpush1.msra.mxu0 0.0
    %1199 = vmatprep.subr.mxu0 0.0
    %1200 = vmatpush1.msra.mxu0 0.0
    %1201 = vmatprep.subr.mxu0 0.0
    %1202 = vmatpush1.msra.mxu0 0.0
    %1203 = vmatprep.mubr.f32.mxu0 0.0
    %1204 = vmatmul.mubr.f32.gmra.mrb[0].mxu0 %v1137
    %v1205 = vpop.f32.mrb[0].mxu0
    %v1206 = vadd.f32 0.0, %v1205
    %v1207 = vpop.f32.mrb[0].mxu0
    %v1208 = vadd.f32 0.0, %v1207
    %1209 = vdwg.mxu0
    %1210 = vmatprep.subr.mxu0 %v241
    %1211 = vmatpush1.msra.mxu0 %v240
    %1212 = vmatprep.subr.mxu0 %v245
    %1213 = vmatpush1.msra.mxu0 %v244
    %1214 = vmatprep.subr.mxu0 %v249
    %1215 = vmatpush1.msra.mxu0 %v248
    %1216 = vmatprep.subr.mxu0 %v253
    %1217 = vmatpush1.msra.mxu0 %v252
    %1218 = vmatprep.subr.mxu0 %v257
    %1219 = vmatpush1.msra.mxu0 %v256
    %1220 = vmatprep.subr.mxu0 %v261
    %1221 = vmatpush1.msra.mxu0 %v260
    %1222 = vmatprep.subr.mxu0 %v265
    %1223 = vmatpush1.msra.mxu0 %v264
    %1224 = vmatprep.subr.mxu0 %v269
    %1225 = vmatpush1.msra.mxu0 %v268
    %1226 = vmatprep.subr.mxu0 0.0
    %1227 = vmatpush1.msra.mxu0 0.0
    %1228 = vmatprep.subr.mxu0 0.0
    %1229 = vmatpush1.msra.mxu0 0.0
    %1230 = vmatprep.subr.mxu0 0.0
    %1231 = vmatpush1.msra.mxu0 0.0
    %1232 = vmatprep.subr.mxu0 0.0
    %1233 = vmatpush1.msra.mxu0 0.0
    %1234 = vmatprep.subr.mxu0 0.0
    %1235 = vmatpush1.msra.mxu0 0.0
    %1236 = vmatprep.subr.mxu0 0.0
    %1237 = vmatpush1.msra.mxu0 0.0
    %1238 = vmatprep.subr.mxu0 0.0
    %1239 = vmatpush1.msra.mxu0 0.0
    %1240 = vmatprep.subr.mxu0 0.0
    %1241 = vmatpush1.msra.mxu0 0.0
    %1242 = vmatprep.subr.mxu0 0.0
    %1243 = vmatpush1.msra.mxu0 0.0
    %1244 = vmatprep.subr.mxu0 0.0
    %1245 = vmatpush1.msra.mxu0 0.0
    %1246 = vmatprep.subr.mxu0 0.0
    %1247 = vmatpush1.msra.mxu0 0.0
    %1248 = vmatprep.subr.mxu0 0.0
    %1249 = vmatpush1.msra.mxu0 0.0
    %1250 = vmatprep.subr.mxu0 0.0
    %1251 = vmatpush1.msra.mxu0 0.0
    %1252 = vmatprep.subr.mxu0 0.0
    %1253 = vmatpush1.msra.mxu0 0.0
    %1254 = vmatprep.subr.mxu0 0.0
    %1255 = vmatpush1.msra.mxu0 0.0
    %1256 = vmatprep.subr.mxu0 0.0
    %1257 = vmatpush1.msra.mxu0 0.0
    %1258 = vmatprep.subr.mxu0 0.0
    %1259 = vmatpush1.msra.mxu0 0.0
    %1260 = vmatprep.subr.mxu0 0.0
    %1261 = vmatpush1.msra.mxu0 0.0
    %1262 = vmatprep.subr.mxu0 0.0
    %1263 = vmatpush1.msra.mxu0 0.0
    %1264 = vmatprep.subr.mxu0 0.0
    %1265 = vmatpush1.msra.mxu0 0.0
    %1266 = vmatprep.subr.mxu0 0.0
    %1267 = vmatpush1.msra.mxu0 0.0
    %1268 = vmatprep.subr.mxu0 0.0
    %1269 = vmatpush1.msra.mxu0 0.0
    %1270 = vmatprep.subr.mxu0 0.0
    %1271 = vmatpush1.msra.mxu0 0.0
    %1272 = vmatprep.subr.mxu0 0.0
    %1273 = vmatpush1.msra.mxu0 0.0
    %1274 = vmatprep.mubr.f32.mxu0 0.0
    %1275 = vmatmul.mubr.f32.gmra.mrb[0].mxu0 %v1137
    %v1276 = vpop.f32.mrb[0].mxu0
    %v1277 = vadd.f32 0.0, %v1276
    %v1278 = vpop.f32.mrb[0].mxu0
    %v1279 = vadd.f32 0.0, %v1278
    %1280 = vdwg.mxu0
    %v1281 = vadd.f32 %v227, %v1206
    %v1282 = vadd.f32 %v228, %v1208
    %v1283 = vadd.f32 %v229, %v1277
    %v1284 = vadd.f32 %v230, %v1279
    %v1285 = vxor.u32 %v1281, 2147483648
    %v1286 = vmul.f32 %v1285, 1.442695
    %v1287 = vpow.pop %v1286
    %v1288 = vadd.f32 %v1287, 1.0
    %v1289 = vrcp.pop %v1288
    %v1290 = vmul.f32 1.0, %v1289
    %v1291 = vxor.u32 %v1282, 2147483648
    %v1292 = vmul.f32 %v1291, 1.442695
    %v1293 = vpow.pop %v1292
    %v1294 = vadd.f32 %v1293, 1.0
    %v1295 = vrcp.pop %v1294
    %v1296 = vmul.f32 1.0, %v1295
    %v1297 = vtanh.pop %v1283
    %v1298 = vxor.u32 %v1284, 2147483648
    %v1299 = vmul.f32 %v1298, 1.442695
    %v1300 = vpow.pop %v1299
    %v1301 = vadd.f32 %v1300, 1.0
    %v1302 = vrcp.pop %v1301
    %v1303 = vmul.f32 1.0, %v1302
    %v1304 = vmul.f32 %v1296, %v1133
    %v1305 = vmul.f32 %v1290, %v1297
    %v1306 = vadd.f32 %v1304, %v1305
    %v1307 = vtanh.pop %v1306
    %v1308 = vmul.f32 %v1303, %v1307
    %v1310 = vsel %vm270, %v1308, 0
    %1312 = vmatprep.subr.mxu0 %v239
    %1313 = vmatpush1.msra.mxu0 %v238
    %1314 = vmatprep.subr.mxu0 %v243
    %1315 = vmatpush1.msra.mxu0 %v242
    %1316 = vmatprep.subr.mxu0 %v247
    %1317 = vmatpush1.msra.mxu0 %v246
    %1318 = vmatprep.subr.mxu0 %v251
    %1319 = vmatpush1.msra.mxu0 %v250
    %1320 = vmatprep.subr.mxu0 %v255
    %1321 = vmatpush1.msra.mxu0 %v254
    %1322 = vmatprep.subr.mxu0 %v259
    %1323 = vmatpush1.msra.mxu0 %v258
    %1324 = vmatprep.subr.mxu0 %v263
    %1325 = vmatpush1.msra.mxu0 %v262
    %1326 = vmatprep.subr.mxu0 %v267
    %1327 = vmatpush1.msra.mxu0 %v266
    %1328 = vmatprep.subr.mxu0 0.0
    %1329 = vmatpush1.msra.mxu0 0.0
    %1330 = vmatprep.subr.mxu0 0.0
    %1331 = vmatpush1.msra.mxu0 0.0
    %1332 = vmatprep.subr.mxu0 0.0
    %1333 = vmatpush1.msra.mxu0 0.0
    %1334 = vmatprep.subr.mxu0 0.0
    %1335 = vmatpush1.msra.mxu0 0.0
    %1336 = vmatprep.subr.mxu0 0.0
    %1337 = vmatpush1.msra.mxu0 0.0
    %1338 = vmatprep.subr.mxu0 0.0
    %1339 = vmatpush1.msra.mxu0 0.0
    %1340 = vmatprep.subr.mxu0 0.0
    %1341 = vmatpush1.msra.mxu0 0.0
    %1342 = vmatprep.subr.mxu0 0.0
    %1343 = vmatpush1.msra.mxu0 0.0
    %1344 = vmatprep.subr.mxu0 0.0
    %1345 = vmatpush1.msra.mxu0 0.0
    %1346 = vmatprep.subr.mxu0 0.0
    %1347 = vmatpush1.msra.mxu0 0.0
    %1348 = vmatprep.subr.mxu0 0.0
    %1349 = vmatpush1.msra.mxu0 0.0
    %1350 = vmatprep.subr.mxu0 0.0
    %1351 = vmatpush1.msra.mxu0 0.0
    %1352 = vmatprep.subr.mxu0 0.0
    %1353 = vmatpush1.msra.mxu0 0.0
    %1354 = vmatprep.subr.mxu0 0.0
    %1355 = vmatpush1.msra.mxu0 0.0
    %1356 = vmatprep.subr.mxu0 0.0
    %1357 = vmatpush1.msra.mxu0 0.0
    %1358 = vmatprep.subr.mxu0 0.0
    %1359 = vmatpush1.msra.mxu0 0.0
    %1360 = vmatprep.subr.mxu0 0.0
    %1361 = vmatpush1.msra.mxu0 0.0
    %1362 = vmatprep.subr.mxu0 0.0
    %1363 = vmatpush1.msra.mxu0 0.0
    %1364 = vmatprep.subr.mxu0 0.0
    %1365 = vmatpush1.msra.mxu0 0.0
    %1366 = vmatprep.subr.mxu0 0.0
    %1367 = vmatpush1.msra.mxu0 0.0
    %1368 = vmatprep.subr.mxu0 0.0
    %1369 = vmatpush1.msra.mxu0 0.0
    %1370 = vmatprep.subr.mxu0 0.0
    %1371 = vmatpush1.msra.mxu0 0.0
    %1372 = vmatprep.subr.mxu0 0.0
    %1373 = vmatpush1.msra.mxu0 0.0
    %1374 = vmatprep.subr.mxu0 0.0
    %1375 = vmatpush1.msra.mxu0 0.0
    %1376 = vmatprep.mubr.f32.mxu0 0.0
    %1377 = vmatmul.mubr.f32.gmra.mrb[0].mxu0 %v1310
    %v1378 = vpop.f32.mrb[0].mxu0
    %v1379 = vadd.f32 0.0, %v1378
    %v1380 = vpop.f32.mrb[0].mxu0
    %v1381 = vadd.f32 0.0, %v1380
    %1382 = vdwg.mxu0
    %1383 = vmatprep.subr.mxu0 %v241
    %1384 = vmatpush1.msra.mxu0 %v240
    %1385 = vmatprep.subr.mxu0 %v245
    %1386 = vmatpush1.msra.mxu0 %v244
    %1387 = vmatprep.subr.mxu0 %v249
    %1388 = vmatpush1.msra.mxu0 %v248
    %1389 = vmatprep.subr.mxu0 %v253
    %1390 = vmatpush1.msra.mxu0 %v252
    %1391 = vmatprep.subr.mxu0 %v257
    %1392 = vmatpush1.msra.mxu0 %v256
    %1393 = vmatprep.subr.mxu0 %v261
    %1394 = vmatpush1.msra.mxu0 %v260
    %1395 = vmatprep.subr.mxu0 %v265
    %1396 = vmatpush1.msra.mxu0 %v264
    %1397 = vmatprep.subr.mxu0 %v269
    %1398 = vmatpush1.msra.mxu0 %v268
    %1399 = vmatprep.subr.mxu0 0.0
    %1400 = vmatpush1.msra.mxu0 0.0
    %1401 = vmatprep.subr.mxu0 0.0
    %1402 = vmatpush1.msra.mxu0 0.0
    %1403 = vmatprep.subr.mxu0 0.0
    %1404 = vmatpush1.msra.mxu0 0.0
    %1405 = vmatprep.subr.mxu0 0.0
    %1406 = vmatpush1.msra.mxu0 0.0
    %1407 = vmatprep.subr.mxu0 0.0
    %1408 = vmatpush1.msra.mxu0 0.0
    %1409 = vmatprep.subr.mxu0 0.0
    %1410 = vmatpush1.msra.mxu0 0.0
    %1411 = vmatprep.subr.mxu0 0.0
    %1412 = vmatpush1.msra.mxu0 0.0
    %1413 = vmatprep.subr.mxu0 0.0
    %1414 = vmatpush1.msra.mxu0 0.0
    %1415 = vmatprep.subr.mxu0 0.0
    %1416 = vmatpush1.msra.mxu0 0.0
    %1417 = vmatprep.subr.mxu0 0.0
    %1418 = vmatpush1.msra.mxu0 0.0
    %1419 = vmatprep.subr.mxu0 0.0
    %1420 = vmatpush1.msra.mxu0 0.0
    %1421 = vmatprep.subr.mxu0 0.0
    %1422 = vmatpush1.msra.mxu0 0.0
    %1423 = vmatprep.subr.mxu0 0.0
    %1424 = vmatpush1.msra.mxu0 0.0
    %1425 = vmatprep.subr.mxu0 0.0
    %1426 = vmatpush1.msra.mxu0 0.0
    %1427 = vmatprep.subr.mxu0 0.0
    %1428 = vmatpush1.msra.mxu0 0.0
    %1429 = vmatprep.subr.mxu0 0.0
    %1430 = vmatpush1.msra.mxu0 0.0
    %1431 = vmatprep.subr.mxu0 0.0
    %1432 = vmatpush1.msra.mxu0 0.0
    %1433 = vmatprep.subr.mxu0 0.0
    %1434 = vmatpush1.msra.mxu0 0.0
    %1435 = vmatprep.subr.mxu0 0.0
    %1436 = vmatpush1.msra.mxu0 0.0
    %1437 = vmatprep.subr.mxu0 0.0
    %1438 = vmatpush1.msra.mxu0 0.0
    %1439 = vmatprep.subr.mxu0 0.0
    %1440 = vmatpush1.msra.mxu0 0.0
    %1441 = vmatprep.subr.mxu0 0.0
    %1442 = vmatpush1.msra.mxu0 0.0
    %1443 = vmatprep.subr.mxu0 0.0
    %1444 = vmatpush1.msra.mxu0 0.0
    %1445 = vmatprep.subr.mxu0 0.0
    %1446 = vmatpush1.msra.mxu0 0.0
    %1447 = vmatprep.mubr.f32.mxu0 0.0
    %1448 = vmatmul.mubr.f32.gmra.mrb[0].mxu0 %v1310
    %v1449 = vpop.f32.mrb[0].mxu0
    %v1450 = vadd.f32 0.0, %v1449
    %v1451 = vpop.f32.mrb[0].mxu0
    %v1452 = vadd.f32 0.0, %v1451
    %1453 = vdwg.mxu0
    %v1454 = vadd.f32 %v231, %v1379
    %v1455 = vadd.f32 %v232, %v1381
    %v1456 = vadd.f32 %v233, %v1450
    %v1457 = vadd.f32 %v234, %v1452
    %v1458 = vxor.u32 %v1454, 2147483648
    %v1459 = vmul.f32 %v1458, 1.442695
    %v1460 = vpow.pop %v1459
    %v1461 = vadd.f32 %v1460, 1.0
    %v1462 = vrcp.pop %v1461
    %v1463 = vmul.f32 1.0, %v1462
    %v1464 = vxor.u32 %v1455, 2147483648
    %v1465 = vmul.f32 %v1464, 1.442695
    %v1466 = vpow.pop %v1465
    %v1467 = vadd.f32 %v1466, 1.0
    %v1468 = vrcp.pop %v1467
    %v1469 = vmul.f32 1.0, %v1468
    %v1470 = vtanh.pop %v1456
    %v1471 = vxor.u32 %v1457, 2147483648
    %v1472 = vmul.f32 %v1471, 1.442695
    %v1473 = vpow.pop %v1472
    %v1474 = vadd.f32 %v1473, 1.0
    %v1475 = vrcp.pop %v1474
    %v1476 = vmul.f32 1.0, %v1475
    %v1477 = vmul.f32 %v1469, %v1306
    %v1478 = vmul.f32 %v1463, %v1470
    %v1479 = vadd.f32 %v1477, %v1478
    %v1480 = vtanh.pop %v1479
    %v1481 = vmul.f32 %v1476, %v1480
    %v1483 = vsel %vm270, %v1481, 0
    %1485 = vmatprep.subr.mxu0 %v239
    %1486 = vmatpush1.msra.mxu0 %v238
    %1487 = vmatprep.subr.mxu0 %v243
    %1488 = vmatpush1.msra.mxu0 %v242
    %1489 = vmatprep.subr.mxu0 %v247
    %1490 = vmatpush1.msra.mxu0 %v246
    %1491 = vmatprep.subr.mxu0 %v251
    %1492 = vmatpush1.msra.mxu0 %v250
    %1493 = vmatprep.subr.mxu0 %v255
    %1494 = vmatpush1.msra.mxu0 %v254
    %1495 = vmatprep.subr.mxu0 %v259
    %1496 = vmatpush1.msra.mxu0 %v258
    %1497 = vmatprep.subr.mxu0 %v263
    %1498 = vmatpush1.msra.mxu0 %v262
    %1499 = vmatprep.subr.mxu0 %v267
    %1500 = vmatpush1.msra.mxu0 %v266
    %1501 = vmatprep.subr.mxu0 0.0
    %1502 = vmatpush1.msra.mxu0 0.0
    %1503 = vmatprep.subr.mxu0 0.0
    %1504 = vmatpush1.msra.mxu0 0.0
    %1505 = vmatprep.subr.mxu0 0.0
    %1506 = vmatpush1.msra.mxu0 0.0
    %1507 = vmatprep.subr.mxu0 0.0
    %1508 = vmatpush1.msra.mxu0 0.0
    %1509 = vmatprep.subr.mxu0 0.0
    %1510 = vmatpush1.msra.mxu0 0.0
    %1511 = vmatprep.subr.mxu0 0.0
    %1512 = vmatpush1.msra.mxu0 0.0
    %1513 = vmatprep.subr.mxu0 0.0
    %1514 = vmatpush1.msra.mxu0 0.0
    %1515 = vmatprep.subr.mxu0 0.0
    %1516 = vmatpush1.msra.mxu0 0.0
    %1517 = vmatprep.subr.mxu0 0.0
    %1518 = vmatpush1.msra.mxu0 0.0
    %1519 = vmatprep.subr.mxu0 0.0
    %1520 = vmatpush1.msra.mxu0 0.0
    %1521 = vmatprep.subr.mxu0 0.0
    %1522 = vmatpush1.msra.mxu0 0.0
    %1523 = vmatprep.subr.mxu0 0.0
    %1524 = vmatpush1.msra.mxu0 0.0
    %1525 = vmatprep.subr.mxu0 0.0
    %1526 = vmatpush1.msra.mxu0 0.0
    %1527 = vmatprep.subr.mxu0 0.0
    %1528 = vmatpush1.msra.mxu0 0.0
    %1529 = vmatprep.subr.mxu0 0.0
    %1530 = vmatpush1.msra.mxu0 0.0
    %1531 = vmatprep.subr.mxu0 0.0
    %1532 = vmatpush1.msra.mxu0 0.0
    %1533 = vmatprep.subr.mxu0 0.0
    %1534 = vmatpush1.msra.mxu0 0.0
    %1535 = vmatprep.subr.mxu0 0.0
    %1536 = vmatpush1.msra.mxu0 0.0
    %1537 = vmatprep.subr.mxu0 0.0
    %1538 = vmatpush1.msra.mxu0 0.0
    %1539 = vmatprep.subr.mxu0 0.0
    %1540 = vmatpush1.msra.mxu0 0.0
    %1541 = vmatprep.subr.mxu0 0.0
    %1542 = vmatpush1.msra.mxu0 0.0
    %1543 = vmatprep.subr.mxu0 0.0
    %1544 = vmatpush1.msra.mxu0 0.0
    %1545 = vmatprep.subr.mxu0 0.0
    %1546 = vmatpush1.msra.mxu0 0.0
    %1547 = vmatprep.subr.mxu0 0.0
    %1548 = vmatpush1.msra.mxu0 0.0
    %1549 = vmatprep.mubr.f32.mxu0 0.0
    %1550 = vmatmul.mubr.f32.gmra.mrb[0].mxu0 %v1483
    %v1551 = vpop.f32.mrb[0].mxu0
    %v1552 = vadd.f32 0.0, %v1551
    %v1553 = vpop.f32.mrb[0].mxu0
    %v1554 = vadd.f32 0.0, %v1553
    %1555 = vdwg.mxu0
    %1556 = vmatprep.subr.mxu0 %v241
    %1557 = vmatpush1.msra.mxu0 %v240
    %1558 = vmatprep.subr.mxu0 %v245
    %1559 = vmatpush1.msra.mxu0 %v244
    %1560 = vmatprep.subr.mxu0 %v249
    %1561 = vmatpush1.msra.mxu0 %v248
    %1562 = vmatprep.subr.mxu0 %v253
    %1563 = vmatpush1.msra.mxu0 %v252
    %1564 = vmatprep.subr.mxu0 %v257
    %1565 = vmatpush1.msra.mxu0 %v256
    %1566 = vmatprep.subr.mxu0 %v261
    %1567 = vmatpush1.msra.mxu0 %v260
    %1568 = vmatprep.subr.mxu0 %v265
    %1569 = vmatpush1.msra.mxu0 %v264
    %1570 = vmatprep.subr.mxu0 %v269
    %1571 = vmatpush1.msra.mxu0 %v268
    %1572 = vmatprep.subr.mxu0 0.0
    %1573 = vmatpush1.msra.mxu0 0.0
    %1574 = vmatprep.subr.mxu0 0.0
    %1575 = vmatpush1.msra.mxu0 0.0
    %1576 = vmatprep.subr.mxu0 0.0
    %1577 = vmatpush1.msra.mxu0 0.0
    %1578 = vmatprep.subr.mxu0 0.0
    %1579 = vmatpush1.msra.mxu0 0.0
    %1580 = vmatprep.subr.mxu0 0.0
    %1581 = vmatpush1.msra.mxu0 0.0
    %1582 = vmatprep.subr.mxu0 0.0
    %1583 = vmatpush1.msra.mxu0 0.0
    %1584 = vmatprep.subr.mxu0 0.0
    %1585 = vmatpush1.msra.mxu0 0.0
    %1586 = vmatprep.subr.mxu0 0.0
    %1587 = vmatpush1.msra.mxu0 0.0
    %1588 = vmatprep.subr.mxu0 0.0
    %1589 = vmatpush1.msra.mxu0 0.0
    %1590 = vmatprep.subr.mxu0 0.0
    %1591 = vmatpush1.msra.mxu0 0.0
    %1592 = vmatprep.subr.mxu0 0.0
    %1593 = vmatpush1.msra.mxu0 0.0
    %1594 = vmatprep.subr.mxu0 0.0
    %1595 = vmatpush1.msra.mxu0 0.0
    %1596 = vmatprep.subr.mxu0 0.0
    %1597 = vmatpush1.msra.mxu0 0.0
    %1598 = vmatprep.subr.mxu0 0.0
    %1599 = vmatpush1.msra.mxu0 0.0
    %1600 = vmatprep.subr.mxu0 0.0
    %1601 = vmatpush1.msra.mxu0 0.0
    %1602 = vmatprep.subr.mxu0 0.0
    %1603 = vmatpush1.msra.mxu0 0.0
    %1604 = vmatprep.subr.mxu0 0.0
    %1605 = vmatpush1.msra.mxu0 0.0
    %1606 = vmatprep.subr.mxu0 0.0
    %1607 = vmatpush1.msra.mxu0 0.0
    %1608 = vmatprep.subr.mxu0 0.0
    %1609 = vmatpush1.msra.mxu0 0.0
    %1610 = vmatprep.subr.mxu0 0.0
    %1611 = vmatpush1.msra.mxu0 0.0
    %1612 = vmatprep.subr.mxu0 0.0
    %1613 = vmatpush1.msra.mxu0 0.0
    %1614 = vmatprep.subr.mxu0 0.0
    %1615 = vmatpush1.msra.mxu0 0.0
    %1616 = vmatprep.subr.mxu0 0.0
    %1617 = vmatpush1.msra.mxu0 0.0
    %1618 = vmatprep.subr.mxu0 0.0
    %1619 = vmatpush1.msra.mxu0 0.0
    %1620 = vmatprep.mubr.f32.mxu0 0.0
    %1621 = vmatmul.mubr.f32.gmra.mrb[0].mxu0 %v1483
    %v1622 = vpop.f32.mrb[0].mxu0
    %v1623 = vadd.f32 0.0, %v1622
    %v1624 = vpop.f32.mrb[0].mxu0
    %1625 = vdwg.mxu0
    %v1626 = vadd.f32 %v235, %v1552
    %v1627 = vadd.f32 %v236, %v1554
    %v1628 = vadd.f32 %v237, %v1623
    %v1629 = vxor.u32 %v1626, 2147483648
    %v1630 = vmul.f32 %v1629, 1.442695
    %v1631 = vpow.pop %v1630
    %v1632 = vadd.f32 %v1631, 1.0
    %v1633 = vrcp.pop %v1632
    %v1634 = vmul.f32 1.0, %v1633
    %v1635 = vxor.u32 %v1627, 2147483648
    %v1636 = vmul.f32 %v1635, 1.442695
    %v1637 = vpow.pop %v1636
    %v1638 = vadd.f32 %v1637, 1.0
    %v1639 = vrcp.pop %v1638
    %v1640 = vmul.f32 1.0, %v1639
    %v1641 = vtanh.pop %v1628
    %v1642 = vmul.f32 %v1640, %v1479
    %v1643 = vmul.f32 %v1634, %v1641
    %v1644 = vadd.f32 %v1642, %v1643
    %v1645 = vld [vmem:[#allocation8] sm:$0xff]
    %v1646 = vld [vmem:[#allocation8 + $0x8] sm:$0xff]
    %v1647 = vld [vmem:[#allocation8 + $0x10] sm:$0xff]
    %v1648 = vld [vmem:[#allocation8 + $0x18] sm:$0xff]
    %v1649 = vld [vmem:[#allocation8 + $0x20] sm:$0xff]
    %v1650 = vld [vmem:[#allocation8 + $0x28] sm:$0xff]
    %v1651 = vld [vmem:[#allocation8 + $0x30] sm:$0xff]
    %v1652 = vld [vmem:[#allocation8 + $0x38] sm:$0xff]
    %v1653 = vld [vmem:[%s5] sm:$0x1]
    %v1655 = vlaneseq
    %v1656 = vshrl.u32 %v1655, 7
    %v1657 = vsub.s32 0, %v1656
    %v1658 = vrot.slane %v1653, %v1657
    %v1661 = vsel %vm270, %v1644, 0
    %1663 = vmatprep.subr.mxu0 0.0
    %1664 = vmatpush1.msra.mxu0 %v1645
    %1665 = vmatprep.subr.mxu0 0.0
    %1666 = vmatpush1.msra.mxu0 %v1646
    %1667 = vmatprep.subr.mxu0 0.0
    %1668 = vmatpush1.msra.mxu0 %v1647
    %1669 = vmatprep.subr.mxu0 0.0
    %1670 = vmatpush1.msra.mxu0 %v1648
    %1671 = vmatprep.subr.mxu0 0.0
    %1672 = vmatpush1.msra.mxu0 %v1649
    %1673 = vmatprep.subr.mxu0 0.0
    %1674 = vmatpush1.msra.mxu0 %v1650
    %1675 = vmatprep.subr.mxu0 0.0
    %1676 = vmatpush1.msra.mxu0 %v1651
    %1677 = vmatprep.subr.mxu0 0.0
    %1678 = vmatpush1.msra.mxu0 %v1652
    %1679 = vmatprep.subr.mxu0 0.0
    %1680 = vmatpush1.msra.mxu0 0.0
    %1681 = vmatprep.subr.mxu0 0.0
    %1682 = vmatpush1.msra.mxu0 0.0
    %1683 = vmatprep.subr.mxu0 0.0
    %1684 = vmatpush1.msra.mxu0 0.0
    %1685 = vmatprep.subr.mxu0 0.0
    %1686 = vmatpush1.msra.mxu0 0.0
    %1687 = vmatprep.subr.mxu0 0.0
    %1688 = vmatpush1.msra.mxu0 0.0
    %1689 = vmatprep.subr.mxu0 0.0
    %1690 = vmatpush1.msra.mxu0 0.0
    %1691 = vmatprep.subr.mxu0 0.0
    %1692 = vmatpush1.msra.mxu0 0.0
    %1693 = vmatprep.subr.mxu0 0.0
    %1694 = vmatpush1.msra.mxu0 0.0
    %1695 = vmatprep.subr.mxu0 0.0
    %1696 = vmatpush1.msra.mxu0 0.0
    %1697 = vmatprep.subr.mxu0 0.0
    %1698 = vmatpush1.msra.mxu0 0.0
    %1699 = vmatprep.subr.mxu0 0.0
    %1700 = vmatpush1.msra.mxu0 0.0
    %1701 = vmatprep.subr.mxu0 0.0
    %1702 = vmatpush1.msra.mxu0 0.0
    %1703 = vmatprep.subr.mxu0 0.0
    %1704 = vmatpush1.msra.mxu0 0.0
    %1705 = vmatprep.subr.mxu0 0.0
    %1706 = vmatpush1.msra.mxu0 0.0
    %1707 = vmatprep.subr.mxu0 0.0
    %1708 = vmatpush1.msra.mxu0 0.0
    %1709 = vmatprep.subr.mxu0 0.0
    %1710 = vmatpush1.msra.mxu0 0.0
    %1711 = vmatprep.subr.mxu0 0.0
    %1712 = vmatpush1.msra.mxu0 0.0
    %1713 = vmatprep.subr.mxu0 0.0
    %1714 = vmatpush1.msra.mxu0 0.0
    %1715 = vmatprep.subr.mxu0 0.0
    %1716 = vmatpush1.msra.mxu0 0.0
    %1717 = vmatprep.subr.mxu0 0.0
    %1718 = vmatpush1.msra.mxu0 0.0
    %1719 = vmatprep.subr.mxu0 0.0
    %1720 = vmatpush1.msra.mxu0 0.0
    %1721 = vmatprep.subr.mxu0 0.0
    %1722 = vmatpush1.msra.mxu0 0.0
    %1723 = vmatprep.subr.mxu0 0.0
    %1724 = vmatpush1.msra.mxu0 0.0
    %1725 = vmatprep.subr.mxu0 0.0
    %1726 = vmatpush1.msra.mxu0 0.0
    %1727 = vmatprep.mubr.f32.mxu0 0.0
    %1728 = vmatmul.mubr.f32.gmra.mrb[0].mxu0 %v1661
    %v1729 = vpop.f32.mrb[0].mxu0
    %v1730 = vadd.f32 %v1658, %v1729
    %v1731 = vpop.f32.mrb[0].mxu0
    %1732 = vdwg.mxu0
    %1733 = vst [vmem:[#allocation10] sm:$0xff] %v1730
    // Predicated region
    $region42: #{tpu_custom_call.1} parent=1 // pred_check
      _
    $region43: #{tpu_custom_call.1} parent=1 // pred_check_branch
      %1735 = sbr.rel (0) target = $region45
    $region44: #{tpu_custom_call.1} parent=1 // pred_region
      %s1737 = ssub.s32 128, 128
      %1738 = vsyncadd [#allocation4], %s1737
      %s1740 = sshll.u32 [#allocation10], 4
      %s1741 = int_to_ptr.vmem [resolvable:$true] %s1740
      %1743 = dma.vmem_to_hbm [thread:$0]  %s1741, 128, %s6, [#allocation4]
    $region45: #{tpu_custom_call.1} parent=1 // pred_fallthru
      _
    // Predicated region
    $region46: #{tpu_custom_call.1} parent=1 // pred_check
      _
    $region47: #{tpu_custom_call.1} parent=1 // pred_check_branch
      %1745 = sbr.rel (0) target = $region49
    $region48: #{tpu_custom_call.1} parent=1 // pred_region
      %1746 = dma.done [#allocation4], 128
    $region49: #{tpu_custom_call.1} parent=1 // pred_fallthru
      _
    %1747 = vsyncpa [#allocation3], 1
    %1748 = vsyncpa [#allocation6], 1
    %1749 = vsyncpa [#allocation9], 1
    %1750 = vsyncpa [#allocation4], 1

</llo_original>
